<compile_context>
chip_gen: v7x
topology: tpu7x:2x2x1
jax: 0.10.0
libtpu: 0.0.40
codegen_flags: <defaults>
</compile_context>

<pallas_src>
import functools

import numpy as np
import jax
import jax.numpy as jnp
from jax import lax
from jax.experimental import pallas as pl
from jax.experimental.pallas import tpu as pltpu

EPS = 1e-5

# Static geometry implied by the module (fc1 = Linear(3*4*4, 8)):
#   24 -conv3-> 22 -pool-> 11 -conv4-> 8 -pool-> 4.
CI, H, W = 4, 24, 24
K1, CO1 = 3, 2
HO1, WO1 = H - K1 + 1, W - K1 + 1              # 22, 22
HP1, WP1 = HO1 // 2, WO1 // 2                  # 11, 11
K2, CO2 = 4, 3
HO2, WO2 = HP1 - K2 + 1, WP1 - K2 + 1          # 8, 8
HP2, WP2 = HO2 // 2, WO2 // 2                  # 4, 4
DH, DO = 8, 10                                 # fc1 / fc3 widths

L0 = W * CI                                    # input slab lanes   (96)
L1 = WO1 * CO1                                 # conv1 out lanes    (44)
L1P = L1 - CO1                                 # after W-pool       (42)
L2 = WO2 * CO2                                 # conv2 out lanes    (24)
L2P = L2 - CO2                                 # after W-pool       (21)


# ------------------------------ fused kernel -------------------------------

def _fused_convbn_kernel(x_ref, w1_ref, b1_ref, g1_ref, be1_ref, vm_ref, q_ref,
                         w2_ref, b2_ref, w3_ref, fb1_ref, w4_ref, fb3_ref,
                         o_ref, *, n):
    r0 = n * H
    inv_m1 = 1.0 / (n * HO1 * WO1)

    x = x_ref[...]                                                # (n*H, 96) f32

    # ---- conv1: ONE matmul.  kh -> row-shifted slab copies concatenated along
    #      lanes; kw/ci folded into the block-Toeplitz rows of w1_ref.
    r1 = r0 - (K1 - 1)
    lhs1 = jnp.concatenate([x[kh:kh + r1, :] for kh in range(K1)],
                           axis=1).astype(jnp.bfloat16)           # (r1, 288)
    y1 = jnp.dot(lhs1, w1_ref[...],
                 preferred_element_type=jnp.float32) + b1_ref[...]  # (r1, 44)

    # ---- BatchNorm2d(2), training batch stats, on the MXU:
    #      masked row-reduce -> per-lane sum / sum-of-squares, then a 0/1 matmul
    #      folds the W direction and re-tiles per-channel stats across lanes.
    stats = jnp.dot(vm_ref[...], jnp.concatenate([y1, y1 * y1], axis=1),
                    preferred_element_type=jnp.float32)           # (1, 88)
    stats = jnp.dot(stats, q_ref[...],
                    preferred_element_type=jnp.float32)           # (1, 88)
    mean = stats[:, :L1] * inv_m1
    var = stats[:, L1:] * inv_m1 - mean * mean
    scale = g1_ref[...] * lax.rsqrt(var + EPS)
    y1 = y1 * scale + (be1_ref[...] - mean * scale)

    # ---- maxpool 2x2, then ReLU (pooled values stay uncompacted; compaction is
    #      folded into the next Toeplitz weight rows).
    y1 = jnp.maximum(y1[:, :L1P], y1[:, CO1:])                    # W pairs
    y1 = jnp.maximum(y1[:-1, :], y1[1:, :])                       # H pairs
    z1 = jnp.maximum(y1, 0.0)                                     # (r1-1, 42)

    # ---- conv2 (+ReLU): ONE matmul; pooled H stride 2 -> row shift 2*kh.
    r2 = z1.shape[0] - 2 * (K2 - 1)
    lhs2 = jnp.concatenate([z1[2 * kh:2 * kh + r2, :] for kh in range(K2)],
                           axis=1).astype(jnp.bfloat16)           # (r2, 168)
    y2 = jnp.dot(lhs2, w2_ref[...],
                 preferred_element_type=jnp.float32) + b2_ref[...]
    y2 = jnp.maximum(y2, 0.0)                                     # (r2, 24)

    # ---- maxpool 2x2
    y2 = jnp.maximum(y2[:, :L2P], y2[:, CO2:])                    # W pairs
    z2 = jnp.maximum(y2[:-2, :], y2[2:, :])                       # H pairs (stride-2 rows)

    # ---- fc1 (torch NCHW flatten folded into w3 rows) -> ReLU -> fc3
    r3 = z2.shape[0] - 4 * (HP2 - 1)
    lhs3 = jnp.concatenate([z2[4 * q:4 * q + r3, :] for q in range(HP2)],
                           axis=1).astype(jnp.bfloat16)           # (r3, 84)
    h = jnp.dot(lhs3, w3_ref[...],
                preferred_element_type=jnp.float32) + fb1_ref[...]
    h = jnp.maximum(h, 0.0)                                       # (r3, 8)
    logits = jnp.dot(h.astype(jnp.bfloat16), w4_ref[...],
                     preferred_element_type=jnp.float32) + fb3_ref[...]

    # ---- pick the per-image rows (slab row i*H) -> (N, 10)
    o_ref[...] = jnp.concatenate(
        [logits[i * H:i * H + 1, :] for i in range(n)], axis=0)


# ------------------------------ wrapper / glue ------------------------------

def _prepare_inputs(x, params):
    """Weight-side layout prep (tiny; folded into the jit)."""
    w1, b1, g1, be1, w2, b2, fw1, fb1, fw3, fb3 = params
    n = x.shape[0]
    r1 = n * H - (K1 - 1)

    # Lane-dense (N*H, W*Ci) input slab.  At large batch fold this transpose
    # into the input BlockSpec/index_map instead of a wrapper pass.
    x_slab = jnp.transpose(x, (0, 2, 3, 1)).reshape(n * H, L0).astype(jnp.float32)

    # conv1 block-Toeplitz: row kh*L0 + (w+kw)*CI + ci, col w*CO1 + co.
    kh, kw, w, ci, co = [a.reshape(-1) for a in np.meshgrid(
        np.arange(K1), np.arange(K1), np.arange(WO1), np.arange(CI),
        np.arange(CO1), indexing="ij")]
    tw1 = jnp.zeros((K1 * L0, L1), jnp.float32).at[
        kh * L0 + (w + kw) * CI + ci, w * CO1 + co].set(w1[co, ci, kh, kw])

    # conv2 block-Toeplitz over the uncompacted pooled slab: valid inputs at
    # lanes 2*CO1*u + ci of the 42-lane slab.
    kh, kw, w, ci, co = [a.reshape(-1) for a in np.meshgrid(
        np.arange(K2), np.arange(K2), np.arange(WO2), np.arange(CO1),
        np.arange(CO2), indexing="ij")]
    tw2 = jnp.zeros((K2 * L1P, L2), jnp.float32).at[
        kh * L1P + (w + kw) * 2 * CO1 + ci, w * CO2 + co].set(w2[co, ci, kh, kw])

    # fc1 as a Toeplitz over the pooled conv2 slab; torch's NCHW flatten order
    # (feat = co*16 + q*4 + p) is folded into the rows here.
    q, p, co, o = [a.reshape(-1) for a in np.meshgrid(
        np.arange(HP2), np.arange(WP2), np.arange(CO2), np.arange(DH),
        indexing="ij")]
    tw3 = jnp.zeros((HP2 * L2P, DH), jnp.float32).at[
        q * L2P + p * 2 * CO2 + co, o].set(fw1[o, co * HP2 * WP2 + q * WP2 + p])

    # BN stat helpers: valid-row mask + channel fold / re-tile matrix (0/1).
    vmask = ((np.arange(r1) % H) < HO1).astype(np.float32)[None, :]
    idx = np.arange(2 * L1)
    blk = idx < L1
    ch = (idx % L1) % CO1
    qmat = ((blk[:, None] == blk[None, :]) &
            (ch[:, None] == ch[None, :])).astype(np.float32)

    bf16 = jnp.bfloat16
    return (x_slab,
            tw1.astype(bf16), jnp.tile(b1, WO1)[None, :],
            jnp.tile(g1, WO1)[None, :], jnp.tile(be1, WO1)[None, :],
            jnp.asarray(vmask), jnp.asarray(qmat),
            tw2.astype(bf16), jnp.tile(b2, WO2)[None, :],
            tw3.astype(bf16), fb1[None, :],
            fw3.T.astype(bf16), fb3[None, :])


@jax.jit
def conv_bn_forward(x, params):
    inputs = _prepare_inputs(x, params)
    n = x.shape[0]
    kernel = functools.partial(_fused_convbn_kernel, n=n)
    return pl.pallas_call(
        kernel,
        out_shape=jax.ShapeDtypeStruct((n, DO), jnp.float32),
        in_specs=[pl.BlockSpec(memory_space=pltpu.MemorySpace.VMEM)] * len(inputs),
        out_specs=pl.BlockSpec(memory_space=pltpu.MemorySpace.VMEM),
    )(*inputs)


# --------------------------- params & reference -----------------------------

def init_params(key):
    ks = jax.random.split(key, 8)
    w1 = 0.1 * jax.random.normal(ks[0], (2, 4, 3, 3), jnp.float32)   # Conv2d(4,2,3)
    b1 = 0.1 * jax.random.normal(ks[1], (2,), jnp.float32)
    g1 = jnp.ones((2,), jnp.float32)                                  # BN weight default
    be1 = jnp.zeros((2,), jnp.float32)                                # BN bias default
    w2 = 0.1 * jax.random.normal(ks[2], (3, 2, 4, 4), jnp.float32)   # Conv2d(2,3,4)
    b2 = 0.1 * jax.random.normal(ks[3], (3,), jnp.float32)
    fw1 = 0.1 * jax.random.normal(ks[4], (8, 48), jnp.float32)       # Linear(48,8)
    fb1 = 0.1 * jax.random.normal(ks[5], (8,), jnp.float32)
    fw3 = 0.1 * jax.random.normal(ks[6], (10, 8), jnp.float32)       # Linear(8,10)
    fb3 = 0.1 * jax.random.normal(ks[7], (10,), jnp.float32)
    return (w1, b1, g1, be1, w2, b2, fw1, fb1, fw3, fb3)


def reference(x, params):
    # Pure-JAX replica of the PyTorch forward (training-mode BN batch stats).
    w1, b1, g1, be1, w2, b2, fw1, fb1, fw3, fb3 = params
    dn = ('NCHW', 'OIHW', 'NCHW')
    y = lax.conv_general_dilated(x, w1, (1, 1), 'VALID', dimension_numbers=dn)
    y = y + b1[None, :, None, None]
    mean = y.mean(axis=(0, 2, 3), keepdims=True)
    var = ((y - mean) ** 2).mean(axis=(0, 2, 3), keepdims=True)
    y = (y - mean) / jnp.sqrt(var + EPS) * g1[None, :, None, None] + be1[None, :, None, None]
    y = lax.reduce_window(y, -jnp.inf, lax.max, (1, 1, 2, 2), (1, 1, 2, 2), 'VALID')
    y = jnp.maximum(y, 0.0)
    y = lax.conv_general_dilated(y, w2, (1, 1), 'VALID', dimension_numbers=dn)
    y = y + b2[None, :, None, None]
    y = jnp.maximum(y, 0.0)
    y = lax.reduce_window(y, -jnp.inf, lax.max, (1, 1, 2, 2), (1, 1, 2, 2), 'VALID')
    y = y.reshape(y.shape[0], -1)
    y = jnp.maximum(y @ fw1.T + fb1, 0.0)
    return y @ fw3.T + fb3


if __name__ == "__main__":
    key = jax.random.PRNGKey(0)
    kx, kp = jax.random.split(key)
    # 24x24 input: 24 -conv3-> 22 -pool-> 11 -conv4-> 8 -pool-> 4, so 3*4*4=48 flat.
    x = jax.random.normal(kx, (2, 4, 24, 24), jnp.float32)
    params = init_params(kp)

    out = jax.block_until_ready(conv_bn_forward(x, params))
    assert out.shape == (2, 10), out.shape

    ref = reference(x, params)
    assert jnp.allclose(out, ref, rtol=1e-2, atol=1e-2), (out, ref)
    print("KERNEL_OK")
</pallas_src>

<mosaic_0001>
module attributes {stable_mosaic.version = 11 : i64} {
  func.func @_fused_convbn_kernel(%arg0: memref<48x96xf32, #tpu.memory_space<vmem>>, %arg1: memref<288x44xbf16, #tpu.memory_space<vmem>>, %arg2: memref<1x44xf32, #tpu.memory_space<vmem>>, %arg3: memref<1x44xf32, #tpu.memory_space<vmem>>, %arg4: memref<1x44xf32, #tpu.memory_space<vmem>>, %arg5: memref<1x46xf32, #tpu.memory_space<vmem>>, %arg6: memref<88x88xf32, #tpu.memory_space<vmem>>, %arg7: memref<168x24xbf16, #tpu.memory_space<vmem>>, %arg8: memref<1x24xf32, #tpu.memory_space<vmem>>, %arg9: memref<84x8xbf16, #tpu.memory_space<vmem>>, %arg10: memref<1x8xf32, #tpu.memory_space<vmem>>, %arg11: memref<8x10xbf16, #tpu.memory_space<vmem>>, %arg12: memref<1x10xf32, #tpu.memory_space<vmem>>, %arg13: memref<2x10xf32, #tpu.memory_space<vmem>>) attributes {dimension_semantics = [], scalar_prefetch = 0 : i64, scratch_operands = 0 : i64, tpu.core_type = #tpu.core_type<tc>} {
    %c0 = arith.constant 0 : index
    %c0_0 = arith.constant 0 : index
    %0 = vector.load %arg0[%c0, %c0_0] : memref<48x96xf32, #tpu.memory_space<vmem>>, vector<48x96xf32>
    %1 = vector.extract_strided_slice %0 {offsets = [0, 0], sizes = [46, 96], strides = [1, 1]} : vector<48x96xf32> to vector<46x96xf32>
    %2 = vector.extract_strided_slice %0 {offsets = [1, 0], sizes = [46, 96], strides = [1, 1]} : vector<48x96xf32> to vector<46x96xf32>
    %3 = vector.extract_strided_slice %0 {offsets = [2, 0], sizes = [46, 96], strides = [1, 1]} : vector<48x96xf32> to vector<46x96xf32>
    %4 = tpu.concatenate %1, %2, %3 in 1 : vector<46x96xf32>, vector<46x96xf32>, vector<46x96xf32> -> vector<46x288xf32>
    %5 = arith.truncf %4 : vector<46x288xf32> to vector<46x288xbf16>
    %c0_1 = arith.constant 0 : index
    %c0_2 = arith.constant 0 : index
    %6 = vector.load %arg1[%c0_1, %c0_2] : memref<288x44xbf16, #tpu.memory_space<vmem>>, vector<288x44xbf16>
    %cst = arith.constant dense<0.000000e+00> : vector<46x44xf32>
    %7 = tpu.matmul %5, %6, %cst {dimension_numbers = #tpu.dot_dimension_numbers<[1], [0], [0], [1], [0, 0, 1, 1], [], []>} : vector<46x288xbf16>, vector<288x44xbf16>, vector<46x44xf32> -> vector<46x44xf32>
    %c0_3 = arith.constant 0 : index
    %c0_4 = arith.constant 0 : index
    %8 = vector.load %arg2[%c0_3, %c0_4] : memref<1x44xf32, #tpu.memory_space<vmem>>, vector<1x44xf32>
    %9 = vector.broadcast %8 : vector<1x44xf32> to vector<46x44xf32>
    %10 = arith.addf %7, %9 : vector<46x44xf32>
    %c0_5 = arith.constant 0 : index
    %c0_6 = arith.constant 0 : index
    %11 = vector.load %arg5[%c0_5, %c0_6] : memref<1x46xf32, #tpu.memory_space<vmem>>, vector<1x46xf32>
    %12 = arith.mulf %10, %10 : vector<46x44xf32>
    %13 = tpu.concatenate %10, %12 in 1 : vector<46x44xf32>, vector<46x44xf32> -> vector<46x88xf32>
    %cst_7 = arith.constant dense<0.000000e+00> : vector<1x88xf32>
    %14 = tpu.matmul %11, %13, %cst_7 {dimension_numbers = #tpu.dot_dimension_numbers<[1], [0], [0], [1], [0, 0, 1, 1], [], []>} : vector<1x46xf32>, vector<46x88xf32>, vector<1x88xf32> -> vector<1x88xf32>
    %c0_8 = arith.constant 0 : index
    %c0_9 = arith.constant 0 : index
    %15 = vector.load %arg6[%c0_8, %c0_9] : memref<88x88xf32, #tpu.memory_space<vmem>>, vector<88x88xf32>
    %cst_10 = arith.constant dense<0.000000e+00> : vector<1x88xf32>
    %16 = tpu.matmul %14, %15, %cst_10 {dimension_numbers = #tpu.dot_dimension_numbers<[1], [0], [0], [1], [0, 0, 1, 1], [], []>} : vector<1x88xf32>, vector<88x88xf32>, vector<1x88xf32> -> vector<1x88xf32>
    %17 = vector.extract_strided_slice %16 {offsets = [0, 0], sizes = [1, 44], strides = [1, 1]} : vector<1x88xf32> to vector<1x44xf32>
    %cst_11 = arith.constant 0.00103305781 : f32
    %18 = vector.broadcast %cst_11 : f32 to vector<1x44xf32>
    %19 = arith.mulf %17, %18 : vector<1x44xf32>
    %20 = vector.extract_strided_slice %16 {offsets = [0, 44], sizes = [1, 44], strides = [1, 1]} : vector<1x88xf32> to vector<1x44xf32>
    %cst_12 = arith.constant 0.00103305781 : f32
    %21 = vector.broadcast %cst_12 : f32 to vector<1x44xf32>
    %22 = arith.mulf %20, %21 : vector<1x44xf32>
    %23 = arith.mulf %19, %19 : vector<1x44xf32>
    %24 = arith.subf %22, %23 : vector<1x44xf32>
    %c0_13 = arith.constant 0 : index
    %c0_14 = arith.constant 0 : index
    %25 = vector.load %arg3[%c0_13, %c0_14] : memref<1x44xf32, #tpu.memory_space<vmem>>, vector<1x44xf32>
    %cst_15 = arith.constant 9.99999974E-6 : f32
    %26 = vector.broadcast %cst_15 : f32 to vector<1x44xf32>
    %27 = arith.addf %24, %26 : vector<1x44xf32>
    %28 = math.rsqrt %27 : vector<1x44xf32>
    %29 = arith.mulf %25, %28 : vector<1x44xf32>
    %30 = vector.broadcast %29 : vector<1x44xf32> to vector<46x44xf32>
    %31 = arith.mulf %10, %30 : vector<46x44xf32>
    %c0_16 = arith.constant 0 : index
    %c0_17 = arith.constant 0 : index
    %32 = vector.load %arg4[%c0_16, %c0_17] : memref<1x44xf32, #tpu.memory_space<vmem>>, vector<1x44xf32>
    %33 = arith.mulf %19, %29 : vector<1x44xf32>
    %34 = arith.subf %32, %33 : vector<1x44xf32>
    %35 = vector.broadcast %34 : vector<1x44xf32> to vector<46x44xf32>
    %36 = arith.addf %31, %35 : vector<46x44xf32>
    %37 = vector.extract_strided_slice %36 {offsets = [0, 0], sizes = [46, 42], strides = [1, 1]} : vector<46x44xf32> to vector<46x42xf32>
    %38 = vector.extract_strided_slice %36 {offsets = [0, 2], sizes = [46, 42], strides = [1, 1]} : vector<46x44xf32> to vector<46x42xf32>
    %39 = arith.maximumf %37, %38 : vector<46x42xf32>
    %40 = vector.extract_strided_slice %39 {offsets = [0, 0], sizes = [45, 42], strides = [1, 1]} : vector<46x42xf32> to vector<45x42xf32>
    %41 = vector.extract_strided_slice %39 {offsets = [1, 0], sizes = [45, 42], strides = [1, 1]} : vector<46x42xf32> to vector<45x42xf32>
    %42 = arith.maximumf %40, %41 : vector<45x42xf32>
    %cst_18 = arith.constant 0.000000e+00 : f32
    %43 = vector.broadcast %cst_18 : f32 to vector<45x42xf32>
    %44 = arith.maximumf %42, %43 : vector<45x42xf32>
    %45 = vector.extract_strided_slice %44 {offsets = [0, 0], sizes = [39, 42], strides = [1, 1]} : vector<45x42xf32> to vector<39x42xf32>
    %46 = vector.extract_strided_slice %44 {offsets = [2, 0], sizes = [39, 42], strides = [1, 1]} : vector<45x42xf32> to vector<39x42xf32>
    %47 = vector.extract_strided_slice %44 {offsets = [4, 0], sizes = [39, 42], strides = [1, 1]} : vector<45x42xf32> to vector<39x42xf32>
    %48 = vector.extract_strided_slice %44 {offsets = [6, 0], sizes = [39, 42], strides = [1, 1]} : vector<45x42xf32> to vector<39x42xf32>
    %49 = tpu.concatenate %45, %46, %47, %48 in 1 : vector<39x42xf32>, vector<39x42xf32>, vector<39x42xf32>, vector<39x42xf32> -> vector<39x168xf32>
    %50 = arith.truncf %49 : vector<39x168xf32> to vector<39x168xbf16>
    %c0_19 = arith.constant 0 : index
    %c0_20 = arith.constant 0 : index
    %51 = vector.load %arg7[%c0_19, %c0_20] : memref<168x24xbf16, #tpu.memory_space<vmem>>, vector<168x24xbf16>
    %cst_21 = arith.constant dense<0.000000e+00> : vector<39x24xf32>
    %52 = tpu.matmul %50, %51, %cst_21 {dimension_numbers = #tpu.dot_dimension_numbers<[1], [0], [0], [1], [0, 0, 1, 1], [], []>} : vector<39x168xbf16>, vector<168x24xbf16>, vector<39x24xf32> -> vector<39x24xf32>
    %c0_22 = arith.constant 0 : index
    %c0_23 = arith.constant 0 : index
    %53 = vector.load %arg8[%c0_22, %c0_23] : memref<1x24xf32, #tpu.memory_space<vmem>>, vector<1x24xf32>
    %54 = vector.broadcast %53 : vector<1x24xf32> to vector<39x24xf32>
    %55 = arith.addf %52, %54 : vector<39x24xf32>
    %cst_24 = arith.constant 0.000000e+00 : f32
    %56 = vector.broadcast %cst_24 : f32 to vector<39x24xf32>
    %57 = arith.maximumf %55, %56 : vector<39x24xf32>
    %58 = vector.extract_strided_slice %57 {offsets = [0, 0], sizes = [39, 21], strides = [1, 1]} : vector<39x24xf32> to vector<39x21xf32>
    %59 = vector.extract_strided_slice %57 {offsets = [0, 3], sizes = [39, 21], strides = [1, 1]} : vector<39x24xf32> to vector<39x21xf32>
    %60 = arith.maximumf %58, %59 : vector<39x21xf32>
    %61 = vector.extract_strided_slice %60 {offsets = [0, 0], sizes = [37, 21], strides = [1, 1]} : vector<39x21xf32> to vector<37x21xf32>
    %62 = vector.extract_strided_slice %60 {offsets = [2, 0], sizes = [37, 21], strides = [1, 1]} : vector<39x21xf32> to vector<37x21xf32>
    %63 = arith.maximumf %61, %62 : vector<37x21xf32>
    %64 = vector.extract_strided_slice %63 {offsets = [0, 0], sizes = [25, 21], strides = [1, 1]} : vector<37x21xf32> to vector<25x21xf32>
    %65 = vector.extract_strided_slice %63 {offsets = [4, 0], sizes = [25, 21], strides = [1, 1]} : vector<37x21xf32> to vector<25x21xf32>
    %66 = vector.extract_strided_slice %63 {offsets = [8, 0], sizes = [25, 21], strides = [1, 1]} : vector<37x21xf32> to vector<25x21xf32>
    %67 = vector.extract_strided_slice %63 {offsets = [12, 0], sizes = [25, 21], strides = [1, 1]} : vector<37x21xf32> to vector<25x21xf32>
    %68 = tpu.concatenate %64, %65, %66, %67 in 1 : vector<25x21xf32>, vector<25x21xf32>, vector<25x21xf32>, vector<25x21xf32> -> vector<25x84xf32>
    %69 = arith.truncf %68 : vector<25x84xf32> to vector<25x84xbf16>
    %c0_25 = arith.constant 0 : index
    %c0_26 = arith.constant 0 : index
    %70 = vector.load %arg9[%c0_25, %c0_26] : memref<84x8xbf16, #tpu.memory_space<vmem>>, vector<84x8xbf16>
    %cst_27 = arith.constant dense<0.000000e+00> : vector<25x8xf32>
    %71 = tpu.matmul %69, %70, %cst_27 {dimension_numbers = #tpu.dot_dimension_numbers<[1], [0], [0], [1], [0, 0, 1, 1], [], []>} : vector<25x84xbf16>, vector<84x8xbf16>, vector<25x8xf32> -> vector<25x8xf32>
    %c0_28 = arith.constant 0 : index
    %c0_29 = arith.constant 0 : index
    %72 = vector.load %arg10[%c0_28, %c0_29] : memref<1x8xf32, #tpu.memory_space<vmem>>, vector<1x8xf32>
    %73 = vector.broadcast %72 : vector<1x8xf32> to vector<25x8xf32>
    %74 = arith.addf %71, %73 : vector<25x8xf32>
    %cst_30 = arith.constant 0.000000e+00 : f32
    %75 = vector.broadcast %cst_30 : f32 to vector<25x8xf32>
    %76 = arith.maximumf %74, %75 : vector<25x8xf32>
    %77 = arith.truncf %76 : vector<25x8xf32> to vector<25x8xbf16>
    %c0_31 = arith.constant 0 : index
    %c0_32 = arith.constant 0 : index
    %78 = vector.load %arg11[%c0_31, %c0_32] : memref<8x10xbf16, #tpu.memory_space<vmem>>, vector<8x10xbf16>
    %cst_33 = arith.constant dense<0.000000e+00> : vector<25x10xf32>
    %79 = tpu.matmul %77, %78, %cst_33 {dimension_numbers = #tpu.dot_dimension_numbers<[1], [0], [0], [1], [0, 0, 1, 1], [], []>} : vector<25x8xbf16>, vector<8x10xbf16>, vector<25x10xf32> -> vector<25x10xf32>
    %c0_34 = arith.constant 0 : index
    %c0_35 = arith.constant 0 : index
    %80 = vector.load %arg12[%c0_34, %c0_35] : memref<1x10xf32, #tpu.memory_space<vmem>>, vector<1x10xf32>
    %81 = vector.broadcast %80 : vector<1x10xf32> to vector<25x10xf32>
    %82 = arith.addf %79, %81 : vector<25x10xf32>
    %83 = vector.extract_strided_slice %82 {offsets = [0, 0], sizes = [1, 10], strides = [1, 1]} : vector<25x10xf32> to vector<1x10xf32>
    %84 = vector.extract_strided_slice %82 {offsets = [24, 0], sizes = [1, 10], strides = [1, 1]} : vector<25x10xf32> to vector<1x10xf32>
    %85 = tpu.concatenate %83, %84 in 0 : vector<1x10xf32>, vector<1x10xf32> -> vector<2x10xf32>
    %c0_36 = arith.constant 0 : index
    %c0_37 = arith.constant 0 : index
    %86 = vector.load %arg13[%c0_36, %c0_37] : memref<2x10xf32, #tpu.memory_space<vmem>>, vector<2x10xf32>
    tpu.vector_store %arg13[%c0_36, %c0_37], %85 {strides = array<i32>} : memref<2x10xf32, #tpu.memory_space<vmem>>, vector<2x10xf32>,
    return
  }
}

</mosaic_0001>

<llo_original>
// kernel: tile.23
$region0: #{tile.23}
  #allocation0 [shape = 's32[1]{0}', space=sflag, size = 0x4, scoped, tag = 'scoped memory for tile.23']
  %s0 = inlined_call_operand.vmem [shape: f32[2], index: 0, kind: input, shape index: {}]
  %s1 = inlined_call_operand.vmem [shape: f32[22,2], index: 1, kind: output, shape index: {}]
  // Predicated region
  $region2: #{tile.23} parent=0 // pred_check
    _
  $region3: #{tile.23} parent=0 // pred_check_branch
    %3 = sbr.rel (0) target = $region5
  $region4: #{tile.23} parent=0 // pred_region
    _
  $region5: #{tile.23} parent=0 // pred_fallthru
    _
  %v4 = vld [vmem:[%s0] ss:$0 sm:$0xff]
  %5 = vst [vmem:[%s1] sm:$0xff] %v4
  %s6 = scalar_lea.vmem %s1, 8
  %7 = vst [vmem:[%s6] sm:$0xff] %v4
  %s8 = scalar_lea.vmem %s1, 16
  %9 = vst [vmem:[%s8] sm:$0xff] %v4

// kernel: tile.24
$region0: #{tile.24}
  %s0 = inlined_call_operand.vmem [shape: f32[22,2], index: 0, kind: input, shape index: {}]
  %s1 = inlined_call_operand.vmem [shape: f32[1,44], index: 1, kind: output, shape index: {}]
  $region1: #{tile.24} parent=0
    #allocation0 [shape = 'u8[4096]{0}', space=vmem, size = 0x1000, scoped, tag = 'scoped mem for output reshape']
    %v2 = vld [vmem:[%s0] sm:$0x1]
    %vm3 = vcmask 15360
    %4 = vst.msk [vmem:[#allocation0] sm:$0x1] %vm3, %v2
    %s5 = scalar_lea.vmem %s0, 21
    %v6 = vld [vmem:[%s5] sm:$0x1]
    %7 = vrot.lane.b32.xlu0 %v6, 42
    %v8 = vpop.permute.xlu0 %7
    %vm9 = vcmask 359760
    %10 = vst.msk [vmem:[#allocation0] sm:$0x1] %vm9, %v8
    %s11 = scalar_lea.vmem %s0, 20
    %v12 = vld [vmem:[%s11] sm:$0x1]
    %13 = vrot.lane.b32.xlu0 %v12, 40
    %v14 = vpop.permute.xlu0 %13
    %vm15 = vcmask 343360
    %16 = vst.msk [vmem:[#allocation0] sm:$0x1] %vm15, %v14
    %s17 = scalar_lea.vmem %s0, 19
    %v18 = vld [vmem:[%s17] sm:$0x1]
    %19 = vrot.lane.b32.xlu0 %v18, 38
    %v20 = vpop.permute.xlu0 %19
    %vm21 = vcmask 326960
    %22 = vst.msk [vmem:[#allocation0] sm:$0x1] %vm21, %v20
    %s23 = scalar_lea.vmem %s0, 18
    %v24 = vld [vmem:[%s23] sm:$0x1]
    %25 = vrot.lane.b32.xlu0 %v24, 36
    %v26 = vpop.permute.xlu0 %25
    %vm27 = vcmask 310560
    %28 = vst.msk [vmem:[#allocation0] sm:$0x1] %vm27, %v26
    %s29 = scalar_lea.vmem %s0, 17
    %v30 = vld [vmem:[%s29] sm:$0x1]
    %31 = vrot.lane.b32.xlu0 %v30, 34
    %v32 = vpop.permute.xlu0 %31
    %vm33 = vcmask 294160
    %34 = vst.msk [vmem:[#allocation0] sm:$0x1] %vm33, %v32
    %s35 = scalar_lea.vmem %s0, 16
    %v36 = vld [vmem:[%s35] sm:$0x1]
    %37 = vrot.lane.b32.xlu0 %v36, 32
    %v38 = vpop.permute.xlu0 %37
    %vm39 = vcmask 277760
    %40 = vst.msk [vmem:[#allocation0] sm:$0x1] %vm39, %v38
    %s41 = scalar_lea.vmem %s0, 15
    %v42 = vld [vmem:[%s41] sm:$0x1]
    %43 = vrot.lane.b32.xlu0 %v42, 30
    %v44 = vpop.permute.xlu0 %43
    %vm45 = vcmask 261360
    %46 = vst.msk [vmem:[#allocation0] sm:$0x1] %vm45, %v44
    %s47 = scalar_lea.vmem %s0, 14
    %v48 = vld [vmem:[%s47] sm:$0x1]
    %49 = vrot.lane.b32.xlu0 %v48, 28
    %v50 = vpop.permute.xlu0 %49
    %vm51 = vcmask 244960
    %52 = vst.msk [vmem:[#allocation0] sm:$0x1] %vm51, %v50
    %s53 = scalar_lea.vmem %s0, 13
    %v54 = vld [vmem:[%s53] sm:$0x1]
    %55 = vrot.lane.b32.xlu0 %v54, 26
    %v56 = vpop.permute.xlu0 %55
    %vm57 = vcmask 228560
    %58 = vst.msk [vmem:[#allocation0] sm:$0x1] %vm57, %v56
    %s59 = scalar_lea.vmem %s0, 12
    %v60 = vld [vmem:[%s59] sm:$0x1]
    %61 = vrot.lane.b32.xlu0 %v60, 24
    %v62 = vpop.permute.xlu0 %61
    %vm63 = vcmask 212160
    %64 = vst.msk [vmem:[#allocation0] sm:$0x1] %vm63, %v62
    %s65 = scalar_lea.vmem %s0, 11
    %v66 = vld [vmem:[%s65] sm:$0x1]
    %67 = vrot.lane.b32.xlu0 %v66, 22
    %v68 = vpop.permute.xlu0 %67
    %vm69 = vcmask 195760
    %70 = vst.msk [vmem:[#allocation0] sm:$0x1] %vm69, %v68
    %s71 = scalar_lea.vmem %s0, 10
    %v72 = vld [vmem:[%s71] sm:$0x1]
    %73 = vrot.lane.b32.xlu0 %v72, 20
    %v74 = vpop.permute.xlu0 %73
    %vm75 = vcmask 179360
    %76 = vst.msk [vmem:[#allocation0] sm:$0x1] %vm75, %v74
    %s77 = scalar_lea.vmem %s0, 9
    %v78 = vld [vmem:[%s77] sm:$0x1]
    %79 = vrot.lane.b32.xlu0 %v78, 18
    %v80 = vpop.permute.xlu0 %79
    %vm81 = vcmask 162960
    %82 = vst.msk [vmem:[#allocation0] sm:$0x1] %vm81, %v80
    %s83 = scalar_lea.vmem %s0, 8
    %v84 = vld [vmem:[%s83] sm:$0x1]
    %85 = vrot.lane.b32.xlu0 %v84, 16
    %v86 = vpop.permute.xlu0 %85
    %vm87 = vcmask 146560
    %88 = vst.msk [vmem:[#allocation0] sm:$0x1] %vm87, %v86
    %s89 = scalar_lea.vmem %s0, 7
    %v90 = vld [vmem:[%s89] sm:$0x1]
    %91 = vrot.lane.b32.xlu0 %v90, 14
    %v92 = vpop.permute.xlu0 %91
    %vm93 = vcmask 130160
    %94 = vst.msk [vmem:[#allocation0] sm:$0x1] %vm93, %v92
    %s95 = scalar_lea.vmem %s0, 6
    %v96 = vld [vmem:[%s95] sm:$0x1]
    %97 = vrot.lane.b32.xlu0 %v96, 12
    %v98 = vpop.permute.xlu0 %97
    %vm99 = vcmask 113760
    %100 = vst.msk [vmem:[#allocation0] sm:$0x1] %vm99, %v98
    %s101 = scalar_lea.vmem %s0, 5
    %v102 = vld [vmem:[%s101] sm:$0x1]
    %103 = vrot.lane.b32.xlu0 %v102, 10
    %v104 = vpop.permute.xlu0 %103
    %vm105 = vcmask 97360
    %106 = vst.msk [vmem:[#allocation0] sm:$0x1] %vm105, %v104
    %s107 = scalar_lea.vmem %s0, 4
    %v108 = vld [vmem:[%s107] sm:$0x1]
    %109 = vrot.lane.b32.xlu0 %v108, 8
    %v110 = vpop.permute.xlu0 %109
    %vm111 = vcmask 80960
    %112 = vst.msk [vmem:[#allocation0] sm:$0x1] %vm111, %v110
    %s113 = scalar_lea.vmem %s0, 3
    %v114 = vld [vmem:[%s113] sm:$0x1]
    %115 = vrot.lane.b32.xlu0 %v114, 6
    %v116 = vpop.permute.xlu0 %115
    %vm117 = vcmask 64560
    %118 = vst.msk [vmem:[#allocation0] sm:$0x1] %vm117, %v116
    %s119 = scalar_lea.vmem %s0, 2
    %v120 = vld [vmem:[%s119] sm:$0x1]
    %121 = vrot.lane.b32.xlu0 %v120, 4
    %v122 = vpop.permute.xlu0 %121
    %vm123 = vcmask 48160
    %124 = vst.msk [vmem:[#allocation0] sm:$0x1] %vm123, %v122
    %s125 = scalar_lea.vmem %s0, 1
    %v126 = vld [vmem:[%s125] sm:$0x1]
    %127 = vrot.lane.b32.xlu0 %v126, 2
    %v128 = vpop.permute.xlu0 %127
    %vm129 = vcmask 31760
    %130 = vst.msk [vmem:[#allocation0] sm:$0x1] %vm129, %v128
    %s132 = sshllo.u32 0, 1
    %v134 = vld [vmem:[#allocation0] sm:%s132]
    %s135 = sshllo.u32 0, 1
    %136 = vst [vmem:[%s1] sm:%s135] %v134

// kernel: tile.38
$region0: #{tile.38}
  #allocation0 [shape = 's32[1]{0}', space=sflag, size = 0x4, scoped, tag = 'scoped memory for tile.38']
  %s0 = inlined_call_operand.vmem [shape: f32[3], index: 0, kind: input, shape index: {}]
  %s1 = inlined_call_operand.vmem [shape: f32[8,3], index: 1, kind: output, shape index: {}]
  // Predicated region
  $region2: #{tile.38} parent=0 // pred_check
    _
  $region3: #{tile.38} parent=0 // pred_check_branch
    %3 = sbr.rel (0) target = $region5
  $region4: #{tile.38} parent=0 // pred_region
    _
  $region5: #{tile.38} parent=0 // pred_fallthru
    _
  %v4 = vld [vmem:[%s0] ss:$0 sm:$0xff]
  %5 = vst [vmem:[%s1] sm:$0xff] %v4

// kernel: tile.39
$region0: #{tile.39}
  %s0 = inlined_call_operand.vmem [shape: f32[8,3], index: 0, kind: input, shape index: {}]
  %s1 = inlined_call_operand.vmem [shape: f32[1,24], index: 1, kind: output, shape index: {}]
  $region1: #{tile.39} parent=0
    #allocation0 [shape = 'u8[4096]{0}', space=vmem, size = 0x1000, scoped, tag = 'scoped mem for output reshape']
    %v2 = vld [vmem:[%s0] sm:$0x1]
    %vm3 = vcmask 23552
    %4 = vst.msk [vmem:[#allocation0] sm:$0x1] %vm3, %v2
    %s5 = scalar_lea.vmem %s0, 7
    %v6 = vld [vmem:[%s5] sm:$0x1]
    %7 = vrot.lane.b32.xlu0 %v6, 21
    %v8 = vpop.permute.xlu0 %7
    %vm9 = vcmask 195752
    %10 = vst.msk [vmem:[#allocation0] sm:$0x1] %vm9, %v8
    %s11 = scalar_lea.vmem %s0, 6
    %v12 = vld [vmem:[%s11] sm:$0x1]
    %13 = vrot.lane.b32.xlu0 %v12, 18
    %v14 = vpop.permute.xlu0 %13
    %vm15 = vcmask 171152
    %16 = vst.msk [vmem:[#allocation0] sm:$0x1] %vm15, %v14
    %s17 = scalar_lea.vmem %s0, 5
    %v18 = vld [vmem:[%s17] sm:$0x1]
    %19 = vrot.lane.b32.xlu0 %v18, 15
    %v20 = vpop.permute.xlu0 %19
    %vm21 = vcmask 146552
    %22 = vst.msk [vmem:[#allocation0] sm:$0x1] %vm21, %v20
    %s23 = scalar_lea.vmem %s0, 4
    %v24 = vld [vmem:[%s23] sm:$0x1]
    %25 = vrot.lane.b32.xlu0 %v24, 12
    %v26 = vpop.permute.xlu0 %25
    %vm27 = vcmask 121952
    %28 = vst.msk [vmem:[#allocation0] sm:$0x1] %vm27, %v26
    %s29 = scalar_lea.vmem %s0, 3
    %v30 = vld [vmem:[%s29] sm:$0x1]
    %31 = vrot.lane.b32.xlu0 %v30, 9
    %v32 = vpop.permute.xlu0 %31
    %vm33 = vcmask 97352
    %34 = vst.msk [vmem:[#allocation0] sm:$0x1] %vm33, %v32
    %s35 = scalar_lea.vmem %s0, 2
    %v36 = vld [vmem:[%s35] sm:$0x1]
    %37 = vrot.lane.b32.xlu0 %v36, 6
    %v38 = vpop.permute.xlu0 %37
    %vm39 = vcmask 72752
    %40 = vst.msk [vmem:[#allocation0] sm:$0x1] %vm39, %v38
    %s41 = scalar_lea.vmem %s0, 1
    %v42 = vld [vmem:[%s41] sm:$0x1]
    %43 = vrot.lane.b32.xlu0 %v42, 3
    %v44 = vpop.permute.xlu0 %43
    %vm45 = vcmask 48152
    %46 = vst.msk [vmem:[#allocation0] sm:$0x1] %vm45, %v44
    %s48 = sshllo.u32 0, 1
    %v50 = vld [vmem:[#allocation0] sm:%s48]
    %s51 = sshllo.u32 0, 1
    %52 = vst [vmem:[%s1] sm:%s51] %v50

// kernel: conv_bn_forward.1
$region0: #{conv_bn_forward.1}
  #allocation0 [shape = 'u32[]', space=smem, size = 0x4, offset = 0x4, fixed_abs, tag = 'smem constant byte address 0x4 - core index']
  #allocation1 [shape = 'u32[144,128]{1,0:T(1,128)}', space=vmem, size = 0x12000, scoped, tag = 'internal scratch']
  %s0 = inlined_call_operand.vmem [shape: f32[48,96], index: 0, kind: input, shape index: {}]
  %s1 = inlined_call_operand.vmem [shape: bf16[288,44], index: 1, kind: input, shape index: {}]
  %s2 = inlined_call_operand.vmem [shape: f32[1,44], index: 2, kind: input, shape index: {}]
  %s3 = inlined_call_operand.vmem [shape: f32[1,44], index: 3, kind: input, shape index: {}]
  %s4 = inlined_call_operand.vmem [shape: f32[1,44], index: 4, kind: input, shape index: {}]
  %s5 = inlined_call_operand.vmem [shape: f32[1,46], index: 5, kind: input, shape index: {}]
  %s6 = inlined_call_operand.vmem [shape: f32[88,88], index: 6, kind: input, shape index: {}]
  %s7 = inlined_call_operand.vmem [shape: bf16[168,24], index: 7, kind: input, shape index: {}]
  %s8 = inlined_call_operand.vmem [shape: f32[1,24], index: 8, kind: input, shape index: {}]
  %s9 = inlined_call_operand.vmem [shape: bf16[84,8], index: 9, kind: input, shape index: {}]
  %s10 = inlined_call_operand.vmem [shape: f32[1,8], index: 10, kind: input, shape index: {}]
  %s11 = inlined_call_operand.vmem [shape: bf16[8,10], index: 11, kind: input, shape index: {}]
  %s12 = inlined_call_operand.vmem [shape: f32[1,10], index: 12, kind: input, shape index: {}]
  %s13 = inlined_call_operand.hbm [shape: f32[2,10], index: 13, kind: output, shape index: {}]
  %s14 = sld [smem:[#allocation0]]
  $region62: #{conv_bn_forward.1} parent=0
    _
  %s16 = ssub.s32 1, %s14
  %s17 = scalar_select 0, %s16, %s14
  $region1: #{conv_bn_forward.1} parent=0
    #allocation2 [shape = 'u8[1024]{0}', space=vmem, size = 0x400, scoped, tag = 'output window, operand 0, single buffered']
    #allocation3 [shape = 's32[1]{0}', space=sflag, size = 0x4, scoped, tag = 'scoped memory for conv_bn_forward.1']
    %18 = vsyncpa [#allocation3], 0
    // Predicated region
    $region2: #{conv_bn_forward.1} parent=1 // pred_check
      _
    $region3: #{conv_bn_forward.1} parent=1 // pred_check_branch
      %20 = sbr.rel (0) target = $region5
    $region4: #{conv_bn_forward.1} parent=1 // pred_region
      _
    $region5: #{conv_bn_forward.1} parent=1 // pred_fallthru
      _
    // Predicated region
    $region6: #{conv_bn_forward.1} parent=1 // pred_check
      _
    $region7: #{conv_bn_forward.1} parent=1 // pred_check_branch
      %22 = sbr.rel (0) target = $region9
    $region8: #{conv_bn_forward.1} parent=1 // pred_region
      _
    $region9: #{conv_bn_forward.1} parent=1 // pred_fallthru
      _
    // Predicated region
    $region10: #{conv_bn_forward.1} parent=1 // pred_check
      _
    $region11: #{conv_bn_forward.1} parent=1 // pred_check_branch
      %24 = sbr.rel (0) target = $region13
    $region12: #{conv_bn_forward.1} parent=1 // pred_region
      _
    $region13: #{conv_bn_forward.1} parent=1 // pred_fallthru
      _
    // Predicated region
    $region14: #{conv_bn_forward.1} parent=1 // pred_check
      _
    $region15: #{conv_bn_forward.1} parent=1 // pred_check_branch
      %26 = sbr.rel (0) target = $region17
    $region16: #{conv_bn_forward.1} parent=1 // pred_region
      _
    $region17: #{conv_bn_forward.1} parent=1 // pred_fallthru
      _
    // Predicated region
    $region18: #{conv_bn_forward.1} parent=1 // pred_check
      _
    $region19: #{conv_bn_forward.1} parent=1 // pred_check_branch
      %28 = sbr.rel (0) target = $region21
    $region20: #{conv_bn_forward.1} parent=1 // pred_region
      _
    $region21: #{conv_bn_forward.1} parent=1 // pred_fallthru
      _
    // Predicated region
    $region22: #{conv_bn_forward.1} parent=1 // pred_check
      _
    $region23: #{conv_bn_forward.1} parent=1 // pred_check_branch
      %30 = sbr.rel (0) target = $region25
    $region24: #{conv_bn_forward.1} parent=1 // pred_region
      _
    $region25: #{conv_bn_forward.1} parent=1 // pred_fallthru
      _
    // Predicated region
    $region26: #{conv_bn_forward.1} parent=1 // pred_check
      _
    $region27: #{conv_bn_forward.1} parent=1 // pred_check_branch
      %32 = sbr.rel (0) target = $region29
    $region28: #{conv_bn_forward.1} parent=1 // pred_region
      _
    $region29: #{conv_bn_forward.1} parent=1 // pred_fallthru
      _
    // Predicated region
    $region30: #{conv_bn_forward.1} parent=1 // pred_check
      _
    $region31: #{conv_bn_forward.1} parent=1 // pred_check_branch
      %34 = sbr.rel (0) target = $region33
    $region32: #{conv_bn_forward.1} parent=1 // pred_region
      _
    $region33: #{conv_bn_forward.1} parent=1 // pred_fallthru
      _
    // Predicated region
    $region34: #{conv_bn_forward.1} parent=1 // pred_check
      _
    $region35: #{conv_bn_forward.1} parent=1 // pred_check_branch
      %36 = sbr.rel (0) target = $region37
    $region36: #{conv_bn_forward.1} parent=1 // pred_region
      _
    $region37: #{conv_bn_forward.1} parent=1 // pred_fallthru
      _
    // Predicated region
    $region38: #{conv_bn_forward.1} parent=1 // pred_check
      _
    $region39: #{conv_bn_forward.1} parent=1 // pred_check_branch
      %38 = sbr.rel (0) target = $region41
    $region40: #{conv_bn_forward.1} parent=1 // pred_region
      _
    $region41: #{conv_bn_forward.1} parent=1 // pred_fallthru
      _
    // Predicated region
    $region42: #{conv_bn_forward.1} parent=1 // pred_check
      _
    $region43: #{conv_bn_forward.1} parent=1 // pred_check_branch
      %40 = sbr.rel (0) target = $region45
    $region44: #{conv_bn_forward.1} parent=1 // pred_region
      _
    $region45: #{conv_bn_forward.1} parent=1 // pred_fallthru
      _
    // Predicated region
    $region46: #{conv_bn_forward.1} parent=1 // pred_check
      _
    $region47: #{conv_bn_forward.1} parent=1 // pred_check_branch
      %42 = sbr.rel (0) target = $region49
    $region48: #{conv_bn_forward.1} parent=1 // pred_region
      _
    $region49: #{conv_bn_forward.1} parent=1 // pred_fallthru
      _
    // Predicated region
    $region50: #{conv_bn_forward.1} parent=1 // pred_check
      _
    $region51: #{conv_bn_forward.1} parent=1 // pred_check_branch
      %44 = sbr.rel (0) target = $region53
    $region52: #{conv_bn_forward.1} parent=1 // pred_region
      _
    $region53: #{conv_bn_forward.1} parent=1 // pred_fallthru
      _
    %v46 = vld [vmem:[%s0] sm:$0xff]
    %v47 = vld [vmem:[%s0 + $0x8] sm:$0xff]
    %v48 = vld [vmem:[%s0 + $0x10] sm:$0xff]
    %v49 = vld [vmem:[%s0 + $0x18] sm:$0xff]
    %v50 = vld [vmem:[%s0 + $0x20] sm:$0xff]
    %v51 = vld [vmem:[%s0 + $0x28] sm:$0xff]
    %vm58 = vcmask 1046528
    %v59 = vrot.slane %v46, 1
    %v60 = vrot.slane %v47, 1
    %v61 = vsel %vm58, %v59, %v60
    %v62 = vrot.slane %v48, 1
    %v63 = vsel %vm58, %v60, %v62
    %v64 = vrot.slane %v49, 1
    %v65 = vsel %vm58, %v62, %v64
    %v66 = vrot.slane %v50, 1
    %v67 = vsel %vm58, %v64, %v66
    %v68 = vrot.slane %v51, 1
    %v69 = vsel %vm58, %v66, %v68
    %70 = vrot.lane.b32.xlu0 %v61, 96
    %v71 = vpop.permute.xlu0 %70
    %72 = vrot.lane.b32.xlu0 %v63, 96
    %v73 = vpop.permute.xlu0 %72
    %74 = vrot.lane.b32.xlu0 %v65, 96
    %v75 = vpop.permute.xlu0 %74
    %76 = vrot.lane.b32.xlu0 %v67, 96
    %v77 = vpop.permute.xlu0 %76
    %78 = vrot.lane.b32.xlu0 %v69, 96
    %v79 = vpop.permute.xlu0 %78
    %80 = vrot.lane.b32.xlu0 %v68, 96
    %v81 = vpop.permute.xlu0 %80
    %vm88 = vcmask 1045504
    %v89 = vrot.slane %v46, 2
    %v90 = vrot.slane %v47, 2
    %v91 = vsel %vm88, %v89, %v90
    %v92 = vrot.slane %v48, 2
    %v93 = vsel %vm88, %v90, %v92
    %v94 = vrot.slane %v49, 2
    %v95 = vsel %vm88, %v92, %v94
    %v96 = vrot.slane %v50, 2
    %v97 = vsel %vm88, %v94, %v96
    %v98 = vrot.slane %v51, 2
    %v99 = vsel %vm88, %v96, %v98
    %100 = vrot.lane.b32.xlu0 %v91, 64
    %v101 = vpop.permute.xlu0 %100
    %102 = vrot.lane.b32.xlu0 %v93, 64
    %v103 = vpop.permute.xlu0 %102
    %104 = vrot.lane.b32.xlu0 %v95, 64
    %v105 = vpop.permute.xlu0 %104
    %106 = vrot.lane.b32.xlu0 %v97, 64
    %v107 = vpop.permute.xlu0 %106
    %108 = vrot.lane.b32.xlu0 %v99, 64
    %v109 = vpop.permute.xlu0 %108
    %110 = vrot.lane.b32.xlu0 %v98, 64
    %v111 = vpop.permute.xlu0 %110
    %vm118 = vcmask 785408
    %v119 = vsel %vm118, %v46, %v71
    %v120 = vsel %vm118, %v47, %v73
    %v121 = vsel %vm118, %v48, %v75
    %v122 = vsel %vm118, %v49, %v77
    %v123 = vsel %vm118, %v50, %v79
    %v124 = vsel %vm118, %v51, %v81
    %vm125 = vcmask 523264
    %v126 = vsel %vm125, %v71, %v101
    %v127 = vsel %vm125, %v73, %v103
    %v128 = vsel %vm125, %v75, %v105
    %v129 = vsel %vm125, %v77, %v107
    %v130 = vsel %vm125, %v79, %v109
    %v131 = vsel %vm125, %v81, %v111
    %v132 = vpack.c.bf16 %v120, %v119
    %v133 = vpack.c.bf16 %v127, %v126
    %v134 = vpack.c.bf16 %v103, %v101
    %v135 = vpack.c.bf16 %v122, %v121
    %v136 = vpack.c.bf16 %v129, %v128
    %v137 = vpack.c.bf16 %v107, %v105
    %v138 = vpack.c.bf16 %v124, %v123
    %v139 = vpack.c.bf16 %v131, %v130
    %v140 = vpack.c.bf16 %v111, %v109
    %v141 = vld [vmem:[%s1] sm:$0xf]
    %v142 = vld [vmem:[%s1 + $0x4] sm:$0xf]
    %v143 = vld [vmem:[%s1 + $0x8] sm:$0xf]
    %v144 = vld [vmem:[%s1 + $0xc] sm:$0xf]
    %v145 = vld [vmem:[%s1 + $0x10] sm:$0xf]
    %v146 = vld [vmem:[%s1 + $0x14] sm:$0xf]
    %v147 = vld [vmem:[%s1 + $0x18] sm:$0xf]
    %v148 = vld [vmem:[%s1 + $0x1c] sm:$0xf]
    %v149 = vld [vmem:[%s1 + $0x20] sm:$0xf]
    %v150 = vld [vmem:[%s1 + $0x24] sm:$0xf]
    %v151 = vld [vmem:[%s1 + $0x28] sm:$0xf]
    %v152 = vld [vmem:[%s1 + $0x2c] sm:$0xf]
    %v153 = vld [vmem:[%s1 + $0x30] sm:$0xf]
    %v154 = vld [vmem:[%s1 + $0x34] sm:$0xf]
    %v155 = vld [vmem:[%s1 + $0x38] sm:$0xf]
    %v156 = vld [vmem:[%s1 + $0x3c] sm:$0xf]
    %v157 = vld [vmem:[%s1 + $0x40] sm:$0xf]
    %v158 = vld [vmem:[%s1 + $0x44] sm:$0xf]
    %v159 = vld [vmem:[%s1 + $0x48] sm:$0xf]
    %v160 = vld [vmem:[%s1 + $0x4c] sm:$0xf]
    %v161 = vld [vmem:[%s1 + $0x50] sm:$0xf]
    %v162 = vld [vmem:[%s1 + $0x54] sm:$0xf]
    %v163 = vld [vmem:[%s1 + $0x58] sm:$0xf]
    %v164 = vld [vmem:[%s1 + $0x5c] sm:$0xf]
    %v165 = vld [vmem:[%s1 + $0x60] sm:$0xf]
    %v166 = vld [vmem:[%s1 + $0x64] sm:$0xf]
    %v167 = vld [vmem:[%s1 + $0x68] sm:$0xf]
    %v168 = vld [vmem:[%s1 + $0x6c] sm:$0xf]
    %v169 = vld [vmem:[%s1 + $0x70] sm:$0xf]
    %v170 = vld [vmem:[%s1 + $0x74] sm:$0xf]
    %v171 = vld [vmem:[%s1 + $0x78] sm:$0xf]
    %v172 = vld [vmem:[%s1 + $0x7c] sm:$0xf]
    %v173 = vld [vmem:[%s1 + $0x80] sm:$0xf]
    %v174 = vld [vmem:[%s1 + $0x84] sm:$0xf]
    %v175 = vld [vmem:[%s1 + $0x88] sm:$0xf]
    %v176 = vld [vmem:[%s1 + $0x8c] sm:$0xf]
    %v177 = vld [vmem:[%s2] sm:$0x1]
    %v179 = vlaneseq
    %v180 = vshrl.u32 %v179, 7
    %v181 = vsub.s32 0, %v180
    %v182 = vrot.slane %v177, %v181
    %v220 = vunpack.c.l.b16 %v141
    %v221 = vunpack.c.l.b16 %v142
    %v222 = vunpack.c.l.b16 %v143
    %v223 = vunpack.c.l.b16 %v144
    %v224 = vunpack.c.l.b16 %v145
    %v225 = vunpack.c.l.b16 %v146
    %v226 = vunpack.c.l.b16 %v147
    %v227 = vunpack.c.l.b16 %v148
    %v228 = vunpack.c.l.b16 %v149
    %v229 = vunpack.c.l.b16 %v150
    %v230 = vunpack.c.l.b16 %v151
    %v231 = vunpack.c.l.b16 %v152
    %v232 = vunpack.c.l.b16 %v153
    %v233 = vunpack.c.l.b16 %v154
    %v234 = vunpack.c.l.b16 %v155
    %v235 = vunpack.c.l.b16 %v156
    %v236 = vunpack.c.l.b16 %v157
    %v237 = vunpack.c.l.b16 %v158
    %v238 = vunpack.c.l.b16 %v159
    %v239 = vunpack.c.l.b16 %v160
    %v240 = vunpack.c.l.b16 %v161
    %v241 = vunpack.c.l.b16 %v162
    %v242 = vunpack.c.l.b16 %v163
    %v243 = vunpack.c.l.b16 %v164
    %v244 = vunpack.c.l.b16 %v165
    %v245 = vunpack.c.l.b16 %v166
    %v246 = vunpack.c.l.b16 %v167
    %v247 = vunpack.c.l.b16 %v168
    %v248 = vunpack.c.l.b16 %v169
    %v249 = vunpack.c.l.b16 %v170
    %v250 = vunpack.c.l.b16 %v171
    %v251 = vunpack.c.l.b16 %v172
    %v252 = vunpack.c.l.b16 %v173
    %v253 = vunpack.c.l.b16 %v174
    %v254 = vunpack.c.l.b16 %v175
    %v255 = vunpack.c.l.b16 %v176
    %v256 = vpack.c.b16 %v221, %v220
    %v257 = vpack.c.b16 %v223, %v222
    %v258 = vpack.c.b16 %v225, %v224
    %v259 = vpack.c.b16 %v227, %v226
    %v260 = vpack.c.b16 %v229, %v228
    %v261 = vpack.c.b16 %v231, %v230
    %v262 = vpack.c.b16 %v233, %v232
    %v263 = vpack.c.b16 %v235, %v234
    %v264 = vpack.c.b16 %v237, %v236
    %v265 = vpack.c.b16 %v239, %v238
    %v266 = vpack.c.b16 %v241, %v240
    %v267 = vpack.c.b16 %v243, %v242
    %v268 = vpack.c.b16 %v245, %v244
    %v269 = vpack.c.b16 %v247, %v246
    %v270 = vpack.c.b16 %v249, %v248
    %v271 = vpack.c.b16 %v251, %v250
    %v272 = vpack.c.b16 %v253, %v252
    %v273 = vpack.c.b16 %v255, %v254
    %vm292 = vcmask 261120
    %v294 = vsel %vm292, %v134, 0
    %v297 = vsel %vm292, %v137, 0
    %v300 = vsel %vm292, %v140, 0
    %302 = vmatprep.subr.bf16.mxu0 0
    %303 = vmatpush1.bf16.msra.mxu0 %v256
    %304 = vmatprep.subr.bf16.mxu0 0
    %305 = vmatpush1.bf16.msra.mxu0 %v257
    %306 = vmatprep.subr.bf16.mxu0 0
    %307 = vmatpush1.bf16.msra.mxu0 %v258
    %308 = vmatprep.subr.bf16.mxu0 0
    %309 = vmatpush1.bf16.msra.mxu0 %v259
    %310 = vmatprep.subr.bf16.mxu0 0
    %311 = vmatpush1.bf16.msra.mxu0 %v260
    %312 = vmatprep.subr.bf16.mxu0 0
    %313 = vmatpush1.bf16.msra.mxu0 %v261
    %314 = vmatprep.subr.bf16.mxu0 0
    %315 = vmatpush1.bf16.msra.mxu0 %v262
    %316 = vmatprep.subr.bf16.mxu0 0
    %317 = vmatpush1.bf16.msra.mxu0 %v263
    %318 = vmatprep.subr.bf16.mxu0 0
    %319 = vmatpush1.bf16.msra.mxu0 %v264
    %320 = vmatprep.subr.bf16.mxu0 0
    %321 = vmatpush1.bf16.msra.mxu0 %v265
    %322 = vmatprep.subr.bf16.mxu0 0
    %323 = vmatpush1.bf16.msra.mxu0 %v266
    %324 = vmatprep.subr.bf16.mxu0 0
    %325 = vmatpush1.bf16.msra.mxu0 %v267
    %326 = vmatprep.subr.bf16.mxu0 0
    %327 = vmatpush1.bf16.msra.mxu0 %v268
    %328 = vmatprep.subr.bf16.mxu0 0
    %329 = vmatpush1.bf16.msra.mxu0 %v269
    %330 = vmatprep.subr.bf16.mxu0 0
    %331 = vmatpush1.bf16.msra.mxu0 %v270
    %332 = vmatprep.subr.bf16.mxu0 0
    %333 = vmatpush1.bf16.msra.mxu0 %v271
    %334 = vmatprep.mubr.bf16.mxu0 %v133
    %335 = vmatmul.mubr.bf16.gmra.mrb[0].mxu0 %v132
    %v336 = vpop.f32.mrb[0].mxu0
    %v337 = vadd.f32 %v182, %v336
    %v338 = vpop.f32.mrb[0].mxu0
    %v339 = vpop.f32.mrb[0].mxu0
    %v340 = vadd.f32 %v182, %v339
    %v341 = vpop.f32.mrb[0].mxu0
    %342 = vmatprep.mubr.bf16.mxu0 %v136
    %343 = vmatmul.mubr.bf16.gmra.mrb[0].mxu0 %v135
    %v344 = vpop.f32.mrb[0].mxu0
    %v345 = vadd.f32 %v182, %v344
    %v346 = vpop.f32.mrb[0].mxu0
    %v347 = vpop.f32.mrb[0].mxu0
    %v348 = vadd.f32 %v182, %v347
    %v349 = vpop.f32.mrb[0].mxu0
    %350 = vmatprep.mubr.bf16.mxu0 %v139
    %351 = vmatmul.mubr.bf16.gmra.mrb[0].mxu0 %v138
    %v352 = vpop.f32.mrb[0].mxu0
    %v353 = vadd.f32 %v182, %v352
    %v354 = vpop.f32.mrb[0].mxu0
    %v355 = vpop.f32.mrb[0].mxu0
    %v356 = vadd.f32 %v182, %v355
    %v357 = vpop.f32.mrb[0].mxu0
    %358 = vdwg.mxu0
    %359 = vmatprep.subr.bf16.mxu0 0
    %360 = vmatpush1.bf16.msra.mxu0 %v272
    %361 = vmatprep.subr.bf16.mxu0 0
    %362 = vmatpush1.bf16.msra.mxu0 %v273
    %363 = vmatprep.subr.bf16.mxu0 0
    %364 = vmatpush1.bf16.msra.mxu0 0
    %365 = vmatprep.subr.bf16.mxu0 0
    %366 = vmatpush1.bf16.msra.mxu0 0
    %367 = vmatprep.subr.bf16.mxu0 0
    %368 = vmatpush1.bf16.msra.mxu0 0
    %369 = vmatprep.subr.bf16.mxu0 0
    %370 = vmatpush1.bf16.msra.mxu0 0
    %371 = vmatprep.subr.bf16.mxu0 0
    %372 = vmatpush1.bf16.msra.mxu0 0
    %373 = vmatprep.subr.bf16.mxu0 0
    %374 = vmatpush1.bf16.msra.mxu0 0
    %375 = vmatprep.subr.bf16.mxu0 0
    %376 = vmatpush1.bf16.msra.mxu0 0
    %377 = vmatprep.subr.bf16.mxu0 0
    %378 = vmatpush1.bf16.msra.mxu0 0
    %379 = vmatprep.subr.bf16.mxu0 0
    %380 = vmatpush1.bf16.msra.mxu0 0
    %381 = vmatprep.subr.bf16.mxu0 0
    %382 = vmatpush1.bf16.msra.mxu0 0
    %383 = vmatprep.subr.bf16.mxu0 0
    %384 = vmatpush1.bf16.msra.mxu0 0
    %385 = vmatprep.subr.bf16.mxu0 0
    %386 = vmatpush1.bf16.msra.mxu0 0
    %387 = vmatprep.subr.bf16.mxu0 0
    %388 = vmatpush1.bf16.msra.mxu0 0
    %389 = vmatprep.subr.bf16.mxu0 0
    %390 = vmatpush1.bf16.msra.mxu0 0
    %391 = vmatprep.mubr.bf16.mxu0 0
    %392 = vmatmul.mubr.bf16.gmra.mrb[0].mxu0 %v294
    %v393 = vpop.f32.mrb[0].mxu0
    %v394 = vadd.f32 %v337, %v393
    %v395 = vpop.f32.mrb[0].mxu0
    %v396 = vpop.f32.mrb[0].mxu0
    %v397 = vadd.f32 %v340, %v396
    %v398 = vpop.f32.mrb[0].mxu0
    %399 = vmatprep.mubr.bf16.mxu0 0
    %400 = vmatmul.mubr.bf16.gmra.mrb[0].mxu0 %v297
    %v401 = vpop.f32.mrb[0].mxu0
    %v402 = vadd.f32 %v345, %v401
    %v403 = vpop.f32.mrb[0].mxu0
    %v404 = vpop.f32.mrb[0].mxu0
    %v405 = vadd.f32 %v348, %v404
    %v406 = vpop.f32.mrb[0].mxu0
    %407 = vmatprep.mubr.bf16.mxu0 0
    %408 = vmatmul.mubr.bf16.gmra.mrb[0].mxu0 %v300
    %v409 = vpop.f32.mrb[0].mxu0
    %v410 = vadd.f32 %v353, %v409
    %v411 = vpop.f32.mrb[0].mxu0
    %v412 = vpop.f32.mrb[0].mxu0
    %v413 = vadd.f32 %v356, %v412
    %v414 = vpop.f32.mrb[0].mxu0
    %415 = vdwg.mxu0
    %v416 = vld [vmem:[%s5] sm:$0x1]
    %v417 = vmul.f32 %v394, %v394
    %v418 = vmul.f32 %v397, %v397
    %v419 = vmul.f32 %v402, %v402
    %v420 = vmul.f32 %v405, %v405
    %v421 = vmul.f32 %v410, %v410
    %v422 = vmul.f32 %v413, %v413
    %429 = vrot.lane.b32.xlu0 %v417, 44
    %v430 = vpop.permute.xlu0 %429
    %431 = vrot.lane.b32.xlu0 %v418, 44
    %v432 = vpop.permute.xlu0 %431
    %433 = vrot.lane.b32.xlu0 %v419, 44
    %v434 = vpop.permute.xlu0 %433
    %435 = vrot.lane.b32.xlu0 %v420, 44
    %v436 = vpop.permute.xlu0 %435
    %437 = vrot.lane.b32.xlu0 %v421, 44
    %v438 = vpop.permute.xlu0 %437
    %439 = vrot.lane.b32.xlu0 %v422, 44
    %v440 = vpop.permute.xlu0 %439
    %vm447 = vcmask 359424
    %v448 = vsel %vm447, %v394, %v430
    %v449 = vsel %vm447, %v397, %v432
    %v450 = vsel %vm447, %v402, %v434
    %v451 = vsel %vm447, %v405, %v436
    %v452 = vsel %vm447, %v410, %v438
    %v453 = vsel %vm447, %v413, %v440
    %vm454 = vcmask 375808
    %v456 = vsel %vm454, %v416, 0
    %v459 = vsel %vm88, %v453, 0
    %461 = vmatprep.subr.mxu0 0.0
    %462 = vmatpush1.msra.mxu0 %v448
    %463 = vmatprep.subr.mxu0 0.0
    %464 = vmatpush1.msra.mxu0 %v449
    %465 = vmatprep.subr.mxu0 0.0
    %466 = vmatpush1.msra.mxu0 %v450
    %467 = vmatprep.subr.mxu0 0.0
    %468 = vmatpush1.msra.mxu0 %v451
    %469 = vmatprep.subr.mxu0 0.0
    %470 = vmatpush1.msra.mxu0 %v452
    %471 = vmatprep.subr.mxu0 0.0
    %472 = vmatpush1.msra.mxu0 %v459
    %473 = vmatprep.subr.mxu0 0.0
    %474 = vmatpush1.msra.mxu0 0.0
    %475 = vmatprep.subr.mxu0 0.0
    %476 = vmatpush1.msra.mxu0 0.0
    %477 = vmatprep.subr.mxu0 0.0
    %478 = vmatpush1.msra.mxu0 0.0
    %479 = vmatprep.subr.mxu0 0.0
    %480 = vmatpush1.msra.mxu0 0.0
    %481 = vmatprep.subr.mxu0 0.0
    %482 = vmatpush1.msra.mxu0 0.0
    %483 = vmatprep.subr.mxu0 0.0
    %484 = vmatpush1.msra.mxu0 0.0
    %485 = vmatprep.subr.mxu0 0.0
    %486 = vmatpush1.msra.mxu0 0.0
    %487 = vmatprep.subr.mxu0 0.0
    %488 = vmatpush1.msra.mxu0 0.0
    %489 = vmatprep.subr.mxu0 0.0
    %490 = vmatpush1.msra.mxu0 0.0
    %491 = vmatprep.subr.mxu0 0.0
    %492 = vmatpush1.msra.mxu0 0.0
    %493 = vmatprep.subr.mxu0 0.0
    %494 = vmatpush1.msra.mxu0 0.0
    %495 = vmatprep.subr.mxu0 0.0
    %496 = vmatpush1.msra.mxu0 0.0
    %497 = vmatprep.subr.mxu0 0.0
    %498 = vmatpush1.msra.mxu0 0.0
    %499 = vmatprep.subr.mxu0 0.0
    %500 = vmatpush1.msra.mxu0 0.0
    %501 = vmatprep.subr.mxu0 0.0
    %502 = vmatpush1.msra.mxu0 0.0
    %503 = vmatprep.subr.mxu0 0.0
    %504 = vmatpush1.msra.mxu0 0.0
    %505 = vmatprep.subr.mxu0 0.0
    %506 = vmatpush1.msra.mxu0 0.0
    %507 = vmatprep.subr.mxu0 0.0
    %508 = vmatpush1.msra.mxu0 0.0
    %509 = vmatprep.subr.mxu0 0.0
    %510 = vmatpush1.msra.mxu0 0.0
    %511 = vmatprep.subr.mxu0 0.0
    %512 = vmatpush1.msra.mxu0 0.0
    %513 = vmatprep.subr.mxu0 0.0
    %514 = vmatpush1.msra.mxu0 0.0
    %515 = vmatprep.subr.mxu0 0.0
    %516 = vmatpush1.msra.mxu0 0.0
    %517 = vmatprep.subr.mxu0 0.0
    %518 = vmatpush1.msra.mxu0 0.0
    %519 = vmatprep.subr.mxu0 0.0
    %520 = vmatpush1.msra.mxu0 0.0
    %521 = vmatprep.subr.mxu0 0.0
    %522 = vmatpush1.msra.mxu0 0.0
    %523 = vmatprep.subr.mxu0 0.0
    %524 = vmatpush1.msra.mxu0 0.0
    %525 = vmatprep.mubr.f32.mxu0 0.0
    %526 = vmatmul.mubr.f32.gmra.mrb[0].mxu0 %v456
    %v527 = vpop.f32.mrb[0].mxu0
    %v528 = vadd.f32 0.0, %v527
    %v529 = vpop.f32.mrb[0].mxu0
    %530 = vdwg.mxu0
    %v531 = vld [vmem:[%s6] sm:$0xff]
    %v532 = vld [vmem:[%s6 + $0x8] sm:$0xff]
    %v533 = vld [vmem:[%s6 + $0x10] sm:$0xff]
    %v534 = vld [vmem:[%s6 + $0x18] sm:$0xff]
    %v535 = vld [vmem:[%s6 + $0x20] sm:$0xff]
    %v536 = vld [vmem:[%s6 + $0x28] sm:$0xff]
    %v537 = vld [vmem:[%s6 + $0x30] sm:$0xff]
    %v538 = vld [vmem:[%s6 + $0x38] sm:$0xff]
    %v539 = vld [vmem:[%s6 + $0x40] sm:$0xff]
    %v540 = vld [vmem:[%s6 + $0x48] sm:$0xff]
    %v541 = vld [vmem:[%s6 + $0x50] sm:$0xff]
    %vm542 = vcmask 719872
    %v544 = vsel %vm542, %v528, 0
    %546 = vmatprep.subr.mxu0 0.0
    %547 = vmatpush1.msra.mxu0 %v531
    %548 = vmatprep.subr.mxu0 0.0
    %549 = vmatpush1.msra.mxu0 %v532
    %550 = vmatprep.subr.mxu0 0.0
    %551 = vmatpush1.msra.mxu0 %v533
    %552 = vmatprep.subr.mxu0 0.0
    %553 = vmatpush1.msra.mxu0 %v534
    %554 = vmatprep.subr.mxu0 0.0
    %555 = vmatpush1.msra.mxu0 %v535
    %556 = vmatprep.subr.mxu0 0.0
    %557 = vmatpush1.msra.mxu0 %v536
    %558 = vmatprep.subr.mxu0 0.0
    %559 = vmatpush1.msra.mxu0 %v537
    %560 = vmatprep.subr.mxu0 0.0
    %561 = vmatpush1.msra.mxu0 %v538
    %562 = vmatprep.subr.mxu0 0.0
    %563 = vmatpush1.msra.mxu0 %v539
    %564 = vmatprep.subr.mxu0 0.0
    %565 = vmatpush1.msra.mxu0 %v540
    %566 = vmatprep.subr.mxu0 0.0
    %567 = vmatpush1.msra.mxu0 %v541
    %568 = vmatprep.subr.mxu0 0.0
    %569 = vmatpush1.msra.mxu0 0.0
    %570 = vmatprep.subr.mxu0 0.0
    %571 = vmatpush1.msra.mxu0 0.0
    %572 = vmatprep.subr.mxu0 0.0
    %573 = vmatpush1.msra.mxu0 0.0
    %574 = vmatprep.subr.mxu0 0.0
    %575 = vmatpush1.msra.mxu0 0.0
    %576 = vmatprep.subr.mxu0 0.0
    %577 = vmatpush1.msra.mxu0 0.0
    %578 = vmatprep.subr.mxu0 0.0
    %579 = vmatpush1.msra.mxu0 0.0
    %580 = vmatprep.subr.mxu0 0.0
    %581 = vmatpush1.msra.mxu0 0.0
    %582 = vmatprep.subr.mxu0 0.0
    %583 = vmatpush1.msra.mxu0 0.0
    %584 = vmatprep.subr.mxu0 0.0
    %585 = vmatpush1.msra.mxu0 0.0
    %586 = vmatprep.subr.mxu0 0.0
    %587 = vmatpush1.msra.mxu0 0.0
    %588 = vmatprep.subr.mxu0 0.0
    %589 = vmatpush1.msra.mxu0 0.0
    %590 = vmatprep.subr.mxu0 0.0
    %591 = vmatpush1.msra.mxu0 0.0
    %592 = vmatprep.subr.mxu0 0.0
    %593 = vmatpush1.msra.mxu0 0.0
    %594 = vmatprep.subr.mxu0 0.0
    %595 = vmatpush1.msra.mxu0 0.0
    %596 = vmatprep.subr.mxu0 0.0
    %597 = vmatpush1.msra.mxu0 0.0
    %598 = vmatprep.subr.mxu0 0.0
    %599 = vmatpush1.msra.mxu0 0.0
    %600 = vmatprep.subr.mxu0 0.0
    %601 = vmatpush1.msra.mxu0 0.0
    %602 = vmatprep.subr.mxu0 0.0
    %603 = vmatpush1.msra.mxu0 0.0
    %604 = vmatprep.subr.mxu0 0.0
    %605 = vmatpush1.msra.mxu0 0.0
    %606 = vmatprep.subr.mxu0 0.0
    %607 = vmatpush1.msra.mxu0 0.0
    %608 = vmatprep.subr.mxu0 0.0
    %609 = vmatpush1.msra.mxu0 0.0
    %610 = vmatprep.mubr.f32.mxu0 0.0
    %611 = vmatmul.mubr.f32.gmra.mrb[0].mxu0 %v544
    %v612 = vpop.f32.mrb[0].mxu0
    %v613 = vadd.f32 0.0, %v612
    %v614 = vpop.f32.mrb[0].mxu0
    %615 = vdwg.mxu0
    %v616 = vmul.f32 %v613, 0.0010330578
    %v617 = vmul.f32 %v616, %v616
    %619 = vrot.lane.b32.xlu0 %v617, 44
    %v620 = vpop.permute.xlu0 %619
    %v622 = vsub.f32 %v616, %v620
    %v623 = vld [vmem:[%s3] sm:$0x1]
    %v624 = vadd.f32 %v622, 1e-05
    %v625 = vrsqrt.pop %v624
    %v628 = vunpack.c.l.s4 1966171168
    %v629 = vunpack.c.0.s8 %v628
    %v630 = vlaneseq
    %v631 = vshrl.u32 %v630, 7
    %v632 = vsub.s32 %v629, %v631
    %v633 = vrot.slane %v625, %v632
    %v635 = vunpack.c.l.s4 1966171168
    %v636 = vunpack.c.0.s8 %v635
    %v637 = vlaneseq
    %v638 = vshrl.u32 %v637, 7
    %v639 = vsub.s32 %v636, %v638
    %v640 = vrot.slane %v633, %v639
    %641 = vrot.lane.b32.xlu0 %v640, 84
    %v642 = vpop.permute.xlu0 %641
    %v644 = vmul.f32 %v623, %v642
    %v646 = vlaneseq
    %v647 = vshrl.u32 %v646, 7
    %v648 = vsub.s32 0, %v647
    %v649 = vrot.slane %v644, %v648
    %v651 = vmul.f32 %v394, %v649
    %v652 = vmul.f32 %v397, %v649
    %v653 = vmul.f32 %v402, %v649
    %v654 = vmul.f32 %v405, %v649
    %v655 = vmul.f32 %v410, %v649
    %v656 = vmul.f32 %v413, %v649
    %v657 = vld [vmem:[%s4] sm:$0x1]
    %v658 = vmul.f32 %v616, %v644
    %v659 = vsub.f32 %v657, %v658
    %v661 = vlaneseq
    %v662 = vshrl.u32 %v661, 7
    %v663 = vsub.s32 0, %v662
    %v664 = vrot.slane %v659, %v663
    %v666 = vadd.f32 %v651, %v664
    %v667 = vadd.f32 %v652, %v664
    %v668 = vadd.f32 %v653, %v664
    %v669 = vadd.f32 %v654, %v664
    %v670 = vadd.f32 %v655, %v664
    %v671 = vadd.f32 %v656, %v664
    %678 = vrot.lane.b32.xlu0 %v666, 126
    %v679 = vpop.permute.xlu0 %678
    %680 = vrot.lane.b32.xlu0 %v667, 126
    %v681 = vpop.permute.xlu0 %680
    %682 = vrot.lane.b32.xlu0 %v668, 126
    %v683 = vpop.permute.xlu0 %682
    %684 = vrot.lane.b32.xlu0 %v669, 126
    %v685 = vpop.permute.xlu0 %684
    %686 = vrot.lane.b32.xlu0 %v670, 126
    %v687 = vpop.permute.xlu0 %686
    %688 = vrot.lane.b32.xlu0 %v671, 126
    %v689 = vpop.permute.xlu0 %688
    %v696 = vmax.f32 %v666, %v679
    %v697 = vmax.f32 %v667, %v681
    %v698 = vmax.f32 %v668, %v683
    %v699 = vmax.f32 %v669, %v685
    %v700 = vmax.f32 %v670, %v687
    %v701 = vmax.f32 %v671, %v689
    %v708 = vrot.slane %v696, 1
    %v709 = vrot.slane %v697, 1
    %v710 = vsel %vm58, %v708, %v709
    %v711 = vrot.slane %v698, 1
    %v712 = vsel %vm58, %v709, %v711
    %v713 = vrot.slane %v699, 1
    %v714 = vsel %vm58, %v711, %v713
    %v715 = vrot.slane %v700, 1
    %v716 = vsel %vm58, %v713, %v715
    %v717 = vrot.slane %v701, 1
    %v718 = vsel %vm58, %v715, %v717
    %v725 = vmax.f32 %v696, %v710
    %v726 = vmax.f32 %v697, %v712
    %v727 = vmax.f32 %v698, %v714
    %v728 = vmax.f32 %v699, %v716
    %v729 = vmax.f32 %v700, %v718
    %v730 = vmax.f32 %v701, %v717
    %v731 = vmax.f32 %v725, 0.0
    %v732 = vmax.f32 %v726, 0.0
    %v733 = vmax.f32 %v727, 0.0
    %v734 = vmax.f32 %v728, 0.0
    %v735 = vmax.f32 %v729, 0.0
    %v736 = vmax.f32 %v730, 0.0
    %v743 = vrot.slane %v731, 2
    %v744 = vrot.slane %v732, 2
    %v745 = vsel %vm88, %v743, %v744
    %v746 = vrot.slane %v733, 2
    %v747 = vsel %vm88, %v744, %v746
    %v748 = vrot.slane %v734, 2
    %v749 = vsel %vm88, %v746, %v748
    %v750 = vrot.slane %v735, 2
    %v751 = vsel %vm88, %v748, %v750
    %v752 = vrot.slane %v736, 2
    %v753 = vsel %vm88, %v750, %v752
    %754 = vrot.lane.b32.xlu0 %v745, 42
    %v755 = vpop.permute.xlu0 %754
    %756 = vrot.lane.b32.xlu0 %v747, 42
    %v757 = vpop.permute.xlu0 %756
    %758 = vrot.lane.b32.xlu0 %v749, 42
    %v759 = vpop.permute.xlu0 %758
    %760 = vrot.lane.b32.xlu0 %v751, 42
    %v761 = vpop.permute.xlu0 %760
    %762 = vrot.lane.b32.xlu0 %v753, 42
    %v763 = vpop.permute.xlu0 %762
    %vm769 = vcmask 1043456
    %v770 = vrot.slane %v731, 4
    %v771 = vrot.slane %v732, 4
    %v772 = vsel %vm769, %v770, %v771
    %v773 = vrot.slane %v733, 4
    %v774 = vsel %vm769, %v771, %v773
    %v775 = vrot.slane %v734, 4
    %v776 = vsel %vm769, %v773, %v775
    %v777 = vrot.slane %v735, 4
    %v778 = vsel %vm769, %v775, %v777
    %v779 = vrot.slane %v736, 4
    %v780 = vsel %vm769, %v777, %v779
    %781 = vrot.lane.b32.xlu0 %v772, 84
    %v782 = vpop.permute.xlu0 %781
    %783 = vrot.lane.b32.xlu0 %v774, 84
    %v784 = vpop.permute.xlu0 %783
    %785 = vrot.lane.b32.xlu0 %v776, 84
    %v786 = vpop.permute.xlu0 %785
    %787 = vrot.lane.b32.xlu0 %v778, 84
    %v788 = vpop.permute.xlu0 %787
    %789 = vrot.lane.b32.xlu0 %v780, 84
    %v790 = vpop.permute.xlu0 %789
    %vm796 = vcmask 1041408
    %v797 = vrot.slane %v731, 6
    %v798 = vrot.slane %v732, 6
    %v799 = vsel %vm796, %v797, %v798
    %v800 = vrot.slane %v733, 6
    %v801 = vsel %vm796, %v798, %v800
    %v802 = vrot.slane %v734, 6
    %v803 = vsel %vm796, %v800, %v802
    %v804 = vrot.slane %v735, 6
    %v805 = vsel %vm796, %v802, %v804
    %v806 = vrot.slane %v736, 6
    %v807 = vsel %vm796, %v804, %v806
    %808 = vrot.lane.b32.xlu0 %v799, 126
    %v809 = vpop.permute.xlu0 %808
    %810 = vrot.lane.b32.xlu0 %v801, 126
    %v811 = vpop.permute.xlu0 %810
    %812 = vrot.lane.b32.xlu0 %v803, 126
    %v813 = vpop.permute.xlu0 %812
    %814 = vrot.lane.b32.xlu0 %v805, 126
    %v815 = vpop.permute.xlu0 %814
    %816 = vrot.lane.b32.xlu0 %v807, 126
    %v817 = vpop.permute.xlu0 %816
    %vm823 = vcmask 343040
    %v824 = vsel %vm823, %v731, %v755
    %v825 = vsel %vm823, %v732, %v757
    %v826 = vsel %vm823, %v733, %v759
    %v827 = vsel %vm823, %v734, %v761
    %v828 = vsel %vm823, %v735, %v763
    %vm829 = vcmask 687104
    %v830 = vsel %vm829, %v824, %v782
    %v831 = vsel %vm829, %v825, %v784
    %v832 = vsel %vm829, %v826, %v786
    %v833 = vsel %vm829, %v827, %v788
    %v834 = vsel %vm829, %v828, %v790
    %vm835 = vcmask 1031168
    %v836 = vsel %vm835, %v830, %v809
    %v837 = vsel %vm835, %v831, %v811
    %v838 = vsel %vm835, %v832, %v813
    %v839 = vsel %vm835, %v833, %v815
    %v840 = vsel %vm835, %v834, %v817
    %v841 = vpack.c.bf16 %v837, %v836
    %v842 = vpack.c.bf16 %v811, %v809
    %v843 = vpack.c.bf16 %v839, %v838
    %v844 = vpack.c.bf16 %v815, %v813
    %v845 = vpack.c.bf16 %v840, %v840
    %v846 = vpack.c.bf16 %v817, %v817
    %v847 = vld [vmem:[%s7] sm:$0xf]
    %v848 = vld [vmem:[%s7 + $0x4] sm:$0xf]
    %v849 = vld [vmem:[%s7 + $0x8] sm:$0xf]
    %v850 = vld [vmem:[%s7 + $0xc] sm:$0xf]
    %v851 = vld [vmem:[%s7 + $0x10] sm:$0xf]
    %v852 = vld [vmem:[%s7 + $0x14] sm:$0xf]
    %v853 = vld [vmem:[%s7 + $0x18] sm:$0xf]
    %v854 = vld [vmem:[%s7 + $0x1c] sm:$0xf]
    %v855 = vld [vmem:[%s7 + $0x20] sm:$0xf]
    %v856 = vld [vmem:[%s7 + $0x24] sm:$0xf]
    %v857 = vld [vmem:[%s7 + $0x28] sm:$0xf]
    %v858 = vld [vmem:[%s7 + $0x2c] sm:$0xf]
    %v859 = vld [vmem:[%s7 + $0x30] sm:$0xf]
    %v860 = vld [vmem:[%s7 + $0x34] sm:$0xf]
    %v861 = vld [vmem:[%s7 + $0x38] sm:$0xf]
    %v862 = vld [vmem:[%s7 + $0x3c] sm:$0xf]
    %v863 = vld [vmem:[%s7 + $0x40] sm:$0xf]
    %v864 = vld [vmem:[%s7 + $0x44] sm:$0xf]
    %v865 = vld [vmem:[%s7 + $0x48] sm:$0xf]
    %v866 = vld [vmem:[%s7 + $0x4c] sm:$0xf]
    %v867 = vld [vmem:[%s7 + $0x50] sm:$0xf]
    %v868 = vld [vmem:[%s8] sm:$0x1]
    %v870 = vlaneseq
    %v871 = vshrl.u32 %v870, 7
    %v872 = vsub.s32 0, %v871
    %v873 = vrot.slane %v868, %v872
    %v896 = vunpack.c.l.b16 %v847
    %v897 = vunpack.c.l.b16 %v848
    %v898 = vunpack.c.l.b16 %v849
    %v899 = vunpack.c.l.b16 %v850
    %v900 = vunpack.c.l.b16 %v851
    %v901 = vunpack.c.l.b16 %v852
    %v902 = vunpack.c.l.b16 %v853
    %v903 = vunpack.c.l.b16 %v854
    %v904 = vunpack.c.l.b16 %v855
    %v905 = vunpack.c.l.b16 %v856
    %v906 = vunpack.c.l.b16 %v857
    %v907 = vunpack.c.l.b16 %v858
    %v908 = vunpack.c.l.b16 %v859
    %v909 = vunpack.c.l.b16 %v860
    %v910 = vunpack.c.l.b16 %v861
    %v911 = vunpack.c.l.b16 %v862
    %v912 = vunpack.c.l.b16 %v863
    %v913 = vunpack.c.l.b16 %v864
    %v914 = vunpack.c.l.b16 %v865
    %v915 = vunpack.c.l.b16 %v866
    %v916 = vunpack.c.l.b16 %v867
    %v917 = vpack.c.b16 %v897, %v896
    %v918 = vpack.c.b16 %v899, %v898
    %v919 = vpack.c.b16 %v901, %v900
    %v920 = vpack.c.b16 %v903, %v902
    %v921 = vpack.c.b16 %v905, %v904
    %v922 = vpack.c.b16 %v907, %v906
    %v923 = vpack.c.b16 %v909, %v908
    %v924 = vpack.c.b16 %v911, %v910
    %v925 = vpack.c.b16 %v913, %v912
    %v926 = vpack.c.b16 %v915, %v914
    %v927 = vpack.c.b16 %v916, %v916
    %vm938 = vcmask 326656
    %v940 = vsel %vm938, %v842, 0
    %v943 = vsel %vm938, %v844, 0
    %v946 = vsel %vm938, %v846, 0
    %v949 = vsel %vm769, %v927, 0
    %951 = vmatprep.subr.bf16.mxu0 0
    %952 = vmatpush1.bf16.msra.mxu0 %v917
    %953 = vmatprep.subr.bf16.mxu0 0
    %954 = vmatpush1.bf16.msra.mxu0 %v918
    %955 = vmatprep.subr.bf16.mxu0 0
    %956 = vmatpush1.bf16.msra.mxu0 %v919
    %957 = vmatprep.subr.bf16.mxu0 0
    %958 = vmatpush1.bf16.msra.mxu0 %v920
    %959 = vmatprep.subr.bf16.mxu0 0
    %960 = vmatpush1.bf16.msra.mxu0 %v921
    %961 = vmatprep.subr.bf16.mxu0 0
    %962 = vmatpush1.bf16.msra.mxu0 %v922
    %963 = vmatprep.subr.bf16.mxu0 0
    %964 = vmatpush1.bf16.msra.mxu0 %v923
    %965 = vmatprep.subr.bf16.mxu0 0
    %966 = vmatpush1.bf16.msra.mxu0 %v924
    %967 = vmatprep.subr.bf16.mxu0 0
    %968 = vmatpush1.bf16.msra.mxu0 %v925
    %969 = vmatprep.subr.bf16.mxu0 0
    %970 = vmatpush1.bf16.msra.mxu0 %v926
    %971 = vmatprep.subr.bf16.mxu0 0
    %972 = vmatpush1.bf16.msra.mxu0 %v949
    %973 = vmatprep.subr.bf16.mxu0 0
    %974 = vmatpush1.bf16.msra.mxu0 0
    %975 = vmatprep.subr.bf16.mxu0 0
    %976 = vmatpush1.bf16.msra.mxu0 0
    %977 = vmatprep.subr.bf16.mxu0 0
    %978 = vmatpush1.bf16.msra.mxu0 0
    %979 = vmatprep.subr.bf16.mxu0 0
    %980 = vmatpush1.bf16.msra.mxu0 0
    %981 = vmatprep.subr.bf16.mxu0 0
    %982 = vmatpush1.bf16.msra.mxu0 0
    %983 = vmatprep.mubr.bf16.mxu0 %v940
    %984 = vmatmul.mubr.bf16.gmra.mrb[0].mxu0 %v841
    %v985 = vpop.f32.mrb[0].mxu0
    %v986 = vadd.f32 %v873, %v985
    %v987 = vpop.f32.mrb[0].mxu0
    %v988 = vpop.f32.mrb[0].mxu0
    %v989 = vadd.f32 %v873, %v988
    %v990 = vpop.f32.mrb[0].mxu0
    %991 = vmatprep.mubr.bf16.mxu0 %v943
    %992 = vmatmul.mubr.bf16.gmra.mrb[0].mxu0 %v843
    %v993 = vpop.f32.mrb[0].mxu0
    %v994 = vadd.f32 %v873, %v993
    %v995 = vpop.f32.mrb[0].mxu0
    %v996 = vpop.f32.mrb[0].mxu0
    %v997 = vadd.f32 %v873, %v996
    %v998 = vpop.f32.mrb[0].mxu0
    %999 = vmatprep.mubr.bf16.mxu0 %v946
    %1000 = vmatmul.mubr.bf16.gmra.mrb[0].mxu0 %v845
    %v1001 = vpop.f32.mrb[0].mxu0
    %v1002 = vadd.f32 %v873, %v1001
    %v1003 = vpop.f32.mrb[0].mxu0
    %v1004 = vpop.f32.mrb[0].mxu0
    %v1005 = vpop.f32.mrb[0].mxu0
    %1006 = vdwg.mxu0
    %v1007 = vmax.f32 %v986, 0.0
    %v1008 = vmax.f32 %v989, 0.0
    %v1009 = vmax.f32 %v994, 0.0
    %v1010 = vmax.f32 %v997, 0.0
    %v1011 = vmax.f32 %v1002, 0.0
    %1017 = vrot.lane.b32.xlu0 %v1007, 125
    %v1018 = vpop.permute.xlu0 %1017
    %1019 = vrot.lane.b32.xlu0 %v1008, 125
    %v1020 = vpop.permute.xlu0 %1019
    %1021 = vrot.lane.b32.xlu0 %v1009, 125
    %v1022 = vpop.permute.xlu0 %1021
    %1023 = vrot.lane.b32.xlu0 %v1010, 125
    %v1024 = vpop.permute.xlu0 %1023
    %1025 = vrot.lane.b32.xlu0 %v1011, 125
    %v1026 = vpop.permute.xlu0 %1025
    %v1032 = vmax.f32 %v1007, %v1018
    %v1033 = vmax.f32 %v1008, %v1020
    %v1034 = vmax.f32 %v1009, %v1022
    %v1035 = vmax.f32 %v1010, %v1024
    %v1036 = vmax.f32 %v1011, %v1026
    %v1042 = vrot.slane %v1032, 2
    %v1043 = vrot.slane %v1033, 2
    %v1044 = vsel %vm88, %v1042, %v1043
    %v1045 = vrot.slane %v1034, 2
    %v1046 = vsel %vm88, %v1043, %v1045
    %v1047 = vrot.slane %v1035, 2
    %v1048 = vsel %vm88, %v1045, %v1047
    %v1049 = vrot.slane %v1036, 2
    %v1050 = vsel %vm88, %v1047, %v1049
    %v1056 = vmax.f32 %v1032, %v1044
    %v1057 = vmax.f32 %v1033, %v1046
    %v1058 = vmax.f32 %v1034, %v1048
    %v1059 = vmax.f32 %v1035, %v1050
    %v1060 = vmax.f32 %v1036, %v1049
    %v1065 = vrot.slane %v1056, 4
    %v1066 = vrot.slane %v1057, 4
    %v1067 = vsel %vm769, %v1065, %v1066
    %v1068 = vrot.slane %v1058, 4
    %v1069 = vsel %vm769, %v1066, %v1068
    %v1070 = vrot.slane %v1059, 4
    %v1071 = vsel %vm769, %v1068, %v1070
    %1072 = vrot.lane.b32.xlu0 %v1067, 21
    %v1073 = vpop.permute.xlu0 %1072
    %1074 = vrot.lane.b32.xlu0 %v1069, 21
    %v1075 = vpop.permute.xlu0 %1074
    %1076 = vrot.lane.b32.xlu0 %v1071, 21
    %v1077 = vpop.permute.xlu0 %1076
    %1078 = vrot.lane.b32.xlu0 %v1070, 21
    %v1079 = vpop.permute.xlu0 %1078
    %1085 = vrot.lane.b32.xlu0 %v1057, 42
    %v1086 = vpop.permute.xlu0 %1085
    %1087 = vrot.lane.b32.xlu0 %v1058, 42
    %v1088 = vpop.permute.xlu0 %1087
    %1089 = vrot.lane.b32.xlu0 %v1059, 42
    %v1090 = vpop.permute.xlu0 %1089
    %1091 = vrot.lane.b32.xlu0 %v1060, 42
    %v1092 = vpop.permute.xlu0 %1091
    %v1097 = vrot.slane %v1060, 4
    %v1098 = vsel %vm769, %v1070, %v1097
    %1099 = vrot.lane.b32.xlu0 %v1069, 63
    %v1100 = vpop.permute.xlu0 %1099
    %1101 = vrot.lane.b32.xlu0 %v1071, 63
    %v1102 = vpop.permute.xlu0 %1101
    %1103 = vrot.lane.b32.xlu0 %v1098, 63
    %v1104 = vpop.permute.xlu0 %1103
    %1105 = vrot.lane.b32.xlu0 %v1097, 63
    %v1106 = vpop.permute.xlu0 %1105
    %vm1111 = vcmask 171008
    %v1112 = vsel %vm1111, %v1056, %v1073
    %v1113 = vsel %vm1111, %v1057, %v1075
    %v1114 = vsel %vm1111, %v1058, %v1077
    %v1115 = vsel %vm1111, %v1059, %v1079
    %v1116 = vsel %vm823, %v1112, %v1086
    %v1117 = vsel %vm823, %v1113, %v1088
    %v1118 = vsel %vm823, %v1114, %v1090
    %v1119 = vsel %vm823, %v1115, %v1092
    %vm1120 = vcmask 515072
    %v1121 = vsel %vm1120, %v1116, %v1100
    %v1122 = vsel %vm1120, %v1117, %v1102
    %v1123 = vsel %vm1120, %v1118, %v1104
    %v1124 = vsel %vm1120, %v1119, %v1106
    %v1125 = vpack.c.bf16 %v1122, %v1121
    %v1126 = vpack.c.bf16 %v1124, %v1123
    %v1127 = vld [vmem:[%s9] sm:$0xf]
    %v1128 = vld [vmem:[%s9 + $0x4] sm:$0xf]
    %v1129 = vld [vmem:[%s9 + $0x8] sm:$0xf]
    %v1130 = vld [vmem:[%s9 + $0xc] sm:$0xf]
    %v1131 = vld [vmem:[%s9 + $0x10] sm:$0xf]
    %v1132 = vld [vmem:[%s9 + $0x14] sm:$0xf]
    %v1133 = vld [vmem:[%s9 + $0x18] sm:$0xf]
    %v1134 = vld [vmem:[%s9 + $0x1c] sm:$0xf]
    %v1135 = vld [vmem:[%s9 + $0x20] sm:$0xf]
    %v1136 = vld [vmem:[%s9 + $0x24] sm:$0xf]
    %v1137 = vld [vmem:[%s9 + $0x28] sm:$0x3]
    %v1138 = vld [vmem:[%s10] sm:$0x1]
    %v1140 = vlaneseq
    %v1141 = vshrl.u32 %v1140, 7
    %v1142 = vsub.s32 0, %v1141
    %v1143 = vrot.slane %v1138, %v1142
    %v1156 = vunpack.c.l.b16 %v1127
    %v1157 = vunpack.c.l.b16 %v1128
    %v1158 = vunpack.c.l.b16 %v1129
    %v1159 = vunpack.c.l.b16 %v1130
    %v1160 = vunpack.c.l.b16 %v1131
    %v1161 = vunpack.c.l.b16 %v1132
    %v1162 = vunpack.c.l.b16 %v1133
    %v1163 = vunpack.c.l.b16 %v1134
    %v1164 = vunpack.c.l.b16 %v1135
    %v1165 = vunpack.c.l.b16 %v1136
    %v1166 = vunpack.c.l.b16 %v1137
    %v1167 = vpack.c.b16 %v1157, %v1156
    %v1168 = vpack.c.b16 %v1159, %v1158
    %v1169 = vpack.c.b16 %v1161, %v1160
    %v1170 = vpack.c.b16 %v1163, %v1162
    %v1171 = vpack.c.b16 %v1165, %v1164
    %v1172 = vpack.c.b16 %v1166, %v1166
    %v1179 = vsel %vm829, %v1125, 0
    %v1182 = vsel %vm829, %v1126, 0
    %v1185 = vsel %vm796, %v1172, 0
    %1187 = vmatprep.subr.bf16.mxu0 0
    %1188 = vmatpush1.bf16.msra.mxu0 %v1167
    %1189 = vmatprep.subr.bf16.mxu0 0
    %1190 = vmatpush1.bf16.msra.mxu0 %v1168
    %1191 = vmatprep.subr.bf16.mxu0 0
    %1192 = vmatpush1.bf16.msra.mxu0 %v1169
    %1193 = vmatprep.subr.bf16.mxu0 0
    %1194 = vmatpush1.bf16.msra.mxu0 %v1170
    %1195 = vmatprep.subr.bf16.mxu0 0
    %1196 = vmatpush1.bf16.msra.mxu0 %v1171
    %1197 = vmatprep.subr.bf16.mxu0 0
    %1198 = vmatpush1.bf16.msra.mxu0 %v1185
    %1199 = vmatprep.subr.bf16.mxu0 0
    %1200 = vmatpush1.bf16.msra.mxu0 0
    %1201 = vmatprep.subr.bf16.mxu0 0
    %1202 = vmatpush1.bf16.msra.mxu0 0
    %1203 = vmatprep.subr.bf16.mxu0 0
    %1204 = vmatpush1.bf16.msra.mxu0 0
    %1205 = vmatprep.subr.bf16.mxu0 0
    %1206 = vmatpush1.bf16.msra.mxu0 0
    %1207 = vmatprep.subr.bf16.mxu0 0
    %1208 = vmatpush1.bf16.msra.mxu0 0
    %1209 = vmatprep.subr.bf16.mxu0 0
    %1210 = vmatpush1.bf16.msra.mxu0 0
    %1211 = vmatprep.subr.bf16.mxu0 0
    %1212 = vmatpush1.bf16.msra.mxu0 0
    %1213 = vmatprep.subr.bf16.mxu0 0
    %1214 = vmatpush1.bf16.msra.mxu0 0
    %1215 = vmatprep.subr.bf16.mxu0 0
    %1216 = vmatpush1.bf16.msra.mxu0 0
    %1217 = vmatprep.subr.bf16.mxu0 0
    %1218 = vmatpush1.bf16.msra.mxu0 0
    %1219 = vmatprep.mubr.bf16.mxu0 0
    %1220 = vmatmul.mubr.bf16.gmra.mrb[0].mxu0 %v1179
    %v1221 = vpop.f32.mrb[0].mxu0
    %v1222 = vadd.f32 %v1143, %v1221
    %v1223 = vpop.f32.mrb[0].mxu0
    %v1224 = vpop.f32.mrb[0].mxu0
    %v1225 = vadd.f32 %v1143, %v1224
    %v1226 = vpop.f32.mrb[0].mxu0
    %1227 = vmatprep.mubr.bf16.mxu0 0
    %1228 = vmatmul.mubr.bf16.gmra.mrb[0].mxu0 %v1182
    %v1229 = vpop.f32.mrb[0].mxu0
    %v1230 = vadd.f32 %v1143, %v1229
    %v1231 = vpop.f32.mrb[0].mxu0
    %v1232 = vpop.f32.mrb[0].mxu0
    %v1233 = vadd.f32 %v1143, %v1232
    %v1234 = vpop.f32.mrb[0].mxu0
    %1235 = vdwg.mxu0
    %v1236 = vmax.f32 %v1222, 0.0
    %v1237 = vmax.f32 %v1225, 0.0
    %v1238 = vmax.f32 %v1230, 0.0
    %v1239 = vmax.f32 %v1233, 0.0
    %v1240 = vpack.c.bf16 %v1237, %v1236
    %v1241 = vpack.c.bf16 %v1239, %v1238
    %v1242 = vld [vmem:[%s11] sm:$0xf]
    %v1243 = vld [vmem:[%s12] sm:$0x1]
    %v1245 = vlaneseq
    %v1246 = vshrl.u32 %v1245, 7
    %v1247 = vsub.s32 0, %v1246
    %v1248 = vrot.slane %v1243, %v1247
    %vm1250 = vcmask 64512
    %v1252 = vsel %vm1250, %v1240, 0
    %v1255 = vsel %vm1250, %v1241, 0
    %v1258 = vsel %vm769, %v1242, 0
    %1260 = vmatprep.subr.bf16.mxu0 0
    %1261 = vmatpush1.bf16.msra.mxu0 %v1258
    %1262 = vmatprep.subr.bf16.mxu0 0
    %1263 = vmatpush1.bf16.msra.mxu0 0
    %1264 = vmatprep.subr.bf16.mxu0 0
    %1265 = vmatpush1.bf16.msra.mxu0 0
    %1266 = vmatprep.subr.bf16.mxu0 0
    %1267 = vmatpush1.bf16.msra.mxu0 0
    %1268 = vmatprep.subr.bf16.mxu0 0
    %1269 = vmatpush1.bf16.msra.mxu0 0
    %1270 = vmatprep.subr.bf16.mxu0 0
    %1271 = vmatpush1.bf16.msra.mxu0 0
    %1272 = vmatprep.subr.bf16.mxu0 0
    %1273 = vmatpush1.bf16.msra.mxu0 0
    %1274 = vmatprep.subr.bf16.mxu0 0
    %1275 = vmatpush1.bf16.msra.mxu0 0
    %1276 = vmatprep.subr.bf16.mxu0 0
    %1277 = vmatpush1.bf16.msra.mxu0 0
    %1278 = vmatprep.subr.bf16.mxu0 0
    %1279 = vmatpush1.bf16.msra.mxu0 0
    %1280 = vmatprep.subr.bf16.mxu0 0
    %1281 = vmatpush1.bf16.msra.mxu0 0
    %1282 = vmatprep.subr.bf16.mxu0 0
    %1283 = vmatpush1.bf16.msra.mxu0 0
    %1284 = vmatprep.subr.bf16.mxu0 0
    %1285 = vmatpush1.bf16.msra.mxu0 0
    %1286 = vmatprep.subr.bf16.mxu0 0
    %1287 = vmatpush1.bf16.msra.mxu0 0
    %1288 = vmatprep.subr.bf16.mxu0 0
    %1289 = vmatpush1.bf16.msra.mxu0 0
    %1290 = vmatprep.subr.bf16.mxu0 0
    %1291 = vmatpush1.bf16.msra.mxu0 0
    %1292 = vmatprep.mubr.bf16.mxu0 0
    %1293 = vmatmul.mubr.bf16.gmra.mrb[0].mxu0 %v1252
    %v1294 = vpop.f32.mrb[0].mxu0
    %v1295 = vadd.f32 %v1248, %v1294
    %v1296 = vpop.f32.mrb[0].mxu0
    %v1297 = vpop.f32.mrb[0].mxu0
    %v1298 = vpop.f32.mrb[0].mxu0
    %1299 = vmatprep.mubr.bf16.mxu0 0
    %1300 = vmatmul.mubr.bf16.gmra.mrb[0].mxu0 %v1255
    %v1301 = vpop.f32.mrb[0].mxu0
    %v1302 = vpop.f32.mrb[0].mxu0
    %v1303 = vpop.f32.mrb[0].mxu0
    %v1304 = vadd.f32 %v1248, %v1303
    %v1305 = vpop.f32.mrb[0].mxu0
    %1306 = vdwg.mxu0
    %v1308 = vrot.slane %v1304, 7
    %vm1310 = vcmask 1040384
    %v1311 = vsel %vm1310, %v1295, %v1308
    %vm1312 = vcmask 74752
    %1313 = vst.msk [vmem:[#allocation2] sm:$0x3] %vm1312, %v1311
    // Predicated region
    $region54: #{conv_bn_forward.1} parent=1 // pred_check
      _
    $region55: #{conv_bn_forward.1} parent=1 // pred_check_branch
      %1315 = sbr.rel (0) target = $region57
    $region56: #{conv_bn_forward.1} parent=1 // pred_region
      %s1317 = ssub.s32 32, 32
      %1318 = vsyncadd [#allocation3], %s1317
      %s1320 = sshll.u32 [#allocation2], 4
      %s1321 = int_to_ptr.vmem [resolvable:$true] %s1320
      %1323 = dma.vmem_to_hbm [thread:$0]  %s1321, 32, %s13, [#allocation3]
    $region57: #{conv_bn_forward.1} parent=1 // pred_fallthru
      _
    // Predicated region
    $region58: #{conv_bn_forward.1} parent=1 // pred_check
      _
    $region59: #{conv_bn_forward.1} parent=1 // pred_check_branch
      %1325 = sbr.rel (0) target = $region61
    $region60: #{conv_bn_forward.1} parent=1 // pred_region
      %1326 = dma.done [#allocation3], 32
    $region61: #{conv_bn_forward.1} parent=1 // pred_fallthru
      _
    %1327 = vsyncpa [#allocation3], 1

</llo_original>
